<compile_context>
chip_gen: v6e
topology: v6e:2x2x1
jax: 0.10.0
libtpu: 0.0.40
codegen_flags: <defaults>
</compile_context>

<pallas_src>
import functools

import jax
import jax.numpy as jnp
from jax import lax
from jax.experimental import pallas as pl
from jax.experimental.pallas import tpu as pltpu


# ----------------------------------------------------------------------------
# Pallas kernel: one LSTM direction per grid step
# ----------------------------------------------------------------------------
def _bilstm_dir_kernel(emb_ref, mask_ref, wih_ref, whh_ref, b_ref, wout_ref,
                       o_ref, hid_ref, *, seq_len, batch):
    """Block shapes (the leading size-1 grid dim selects the direction):
      emb_ref  [1, L*B, E]   time-major embedded tokens (time-reversed for d=1)
      mask_ref [1, L*B, 1]   1.0 where t < length (time-reversed for d=1)
      wih_ref  [1, E, 4H]
      whh_ref  [1, H, 4H]
      b_ref    [1, 1, 4H]    bias_ih + bias_hh for this direction
      wout_ref [1, H, T]     this direction's half of the output projection
      o_ref    [1, L*B, T]   per-direction emission contribution (no bias)
      hid_ref  scratch [L*B, H]
    """
    H = whh_ref.shape[1]

    wih = wih_ref[0]          # [E, 4H]
    whh = whh_ref[0]          # [H, 4H]
    bias = b_ref[0]           # [1, 4H]
    wout = wout_ref[0]        # [H, T]
    emb = emb_ref[0]          # [L*B, E]
    mask = mask_ref[0]        # [L*B, 1]

    # (1) Input projection hoisted out of the recurrence: one MXU matmul for all
    #     timesteps, with the bias folded in (no per-step broadcast).
    gates_in = jnp.dot(emb, wih, preferred_element_type=jnp.float32) + bias  # [L*B, 4H]

    h = jnp.zeros((batch, H), jnp.float32)
    c = jnp.zeros((batch, H), jnp.float32)

    # (2) Recurrence, fully unrolled (static L), so the scheduler can overlap the
    #     EUP sigmoid/tanh of step s with the h @ whh matmul of step s+1.
    #     PyTorch nn.LSTM gate order: i, f, g, o.
    # TODO(synk): for long sequences switch to lax.fori_loop with partial unroll
    #             and dynamic hid_ref indexing to bound register live ranges.
    for s in range(seq_len):
        lo = s * batch
        gates = gates_in[lo:lo + batch] + jnp.dot(
            h, whh, preferred_element_type=jnp.float32)           # [B, 4H]
        i = jax.nn.sigmoid(gates[:, 0:H])
        f = jax.nn.sigmoid(gates[:, H:2 * H])
        g = jnp.tanh(gates[:, 2 * H:3 * H])
        o = jax.nn.sigmoid(gates[:, 3 * H:4 * H])
        c = f * c + i * g
        h = o * jnp.tanh(c)
        m = mask[lo:lo + batch]                                   # [B, 1]
        h = h * m                # emulate pack_padded: zero state past length
        c = c * m
        hid_ref[lo:lo + batch, :] = h

    # (3) Output projection batched over all timesteps (single MXU matmul).
    #     The output bias and the sum of both directions are added in the wrapper.
    o_ref[0] = jnp.dot(hid_ref[...], wout, preferred_element_type=jnp.float32)


# ----------------------------------------------------------------------------
# Wrapper
# ----------------------------------------------------------------------------
def bilstm_crf_forward(sents, lengths, params):
    (emb_table, wih_f, whh_f, b_f, wih_b, whh_b, b_b, wout, bout, trans) = params
    B, L = sents.shape
    E = emb_table.shape[1]
    H = whh_f.shape[0]
    T = trans.shape[0]
    Bp = ((B + 7) // 8) * 8          # pad batch to the sublane width (8)

    # Glue in plain JAX: embedding gather, length mask, layout prep.
    emb = jnp.take(emb_table, sents, axis=0).astype(jnp.float32)            # [B, L, E]
    mask = (jnp.arange(L)[None, :] < lengths[:, None]).astype(jnp.float32)  # [B, L]
    if Bp != B:
        emb = jnp.pad(emb, ((0, Bp - B), (0, 0), (0, 0)))
        mask = jnp.pad(mask, ((0, Bp - B), (0, 0)))

    emb_t = jnp.transpose(emb, (1, 0, 2))             # [L, Bp, E]  time-major
    mask_t = jnp.transpose(mask)[:, :, None]          # [L, Bp, 1]

    # Direction 0 sees natural time order, direction 1 sees time-reversed data,
    # so the kernel body is direction-agnostic and statically indexed.
    emb_stack = jnp.stack(
        [emb_t.reshape(L * Bp, E), emb_t[::-1].reshape(L * Bp, E)], axis=0)
    mask_stack = jnp.stack(
        [mask_t.reshape(L * Bp, 1), mask_t[::-1].reshape(L * Bp, 1)], axis=0)
    wih_s = jnp.stack([wih_f, wih_b], axis=0)         # [2, E, 4H]
    whh_s = jnp.stack([whh_f, whh_b], axis=0)         # [2, H, 4H]
    b_s = jnp.stack([b_f, b_b], axis=0)               # [2, 1, 4H]
    wout_s = jnp.stack([wout[:H, :], wout[H:, :]], axis=0)   # [2, H, T]
    # TODO(synk): for production sizes cast emb/weights to bf16 (f32 accumulate);
    #             kept f32 here so the in-file reference check stays tight.

    kernel = functools.partial(_bilstm_dir_kernel, seq_len=L, batch=Bp)

    out = pl.pallas_call(
        kernel,
        out_shape=jax.ShapeDtypeStruct((2, L * Bp, T), jnp.float32),
        grid=(2,),
        in_specs=[
            pl.BlockSpec((1, L * Bp, E), lambda d: (d, 0, 0)),
            pl.BlockSpec((1, L * Bp, 1), lambda d: (d, 0, 0)),
            pl.BlockSpec((1, E, 4 * H), lambda d: (d, 0, 0)),
            pl.BlockSpec((1, H, 4 * H), lambda d: (d, 0, 0)),
            pl.BlockSpec((1, 1, 4 * H), lambda d: (d, 0, 0)),
            pl.BlockSpec((1, H, T), lambda d: (d, 0, 0)),
        ],
        out_specs=pl.BlockSpec((1, L * Bp, T), lambda d: (d, 0, 0)),
        scratch_shapes=[pltpu.VMEM((L * Bp, H), jnp.float32)],
        compiler_params=pltpu.CompilerParams(
            # The two directions are independent & latency-bound: on v7x they can
            # be sharded across the two TensorCores; on v5e/v6e it is a 2-step loop.
            dimension_semantics=("parallel",),
            vmem_limit_bytes=8 * 1024 * 1024,
        ),
    )(emb_stack, mask_stack, wih_s, whh_s, b_s, wout_s)

    em_f = out[0].reshape(L, Bp, T)
    em_b = out[1].reshape(L, Bp, T)[::-1]             # undo the time reversal
    emission = em_f + em_b + bout[None]               # [L, Bp, T]
    emission = jnp.transpose(emission, (1, 0, 2))[:B]           # [B, L, T]
    # CRF score expansion (emission.unsqueeze(2) + transition) is left to XLA,
    # keeping the T*T blow-up out of kernel HBM writes / VMEM residency.
    return emission[:, :, None, :] + trans[None, None, :, :]    # [B, L, T, T]


# ----------------------------------------------------------------------------
# Pure-JAX reference (same semantics) for a correctness check
# ----------------------------------------------------------------------------
def bilstm_crf_reference(sents, lengths, params):
    (emb_table, wih_f, whh_f, b_f, wih_b, whh_b, b_b, wout, bout, trans) = params
    B, L = sents.shape
    H = whh_f.shape[0]

    emb = jnp.take(emb_table, sents, axis=0)                       # [B, L, E]
    mask = (jnp.arange(L)[None, :] < lengths[:, None]).astype(jnp.float32)

    def run_dir(wih, whh, b, reverse):
        def step(carry, xs):
            h, c = carry
            x, m = xs
            gates = x @ wih + h @ whh + b
            i = jax.nn.sigmoid(gates[:, :H])
            f = jax.nn.sigmoid(gates[:, H:2 * H])
            g = jnp.tanh(gates[:, 2 * H:3 * H])
            o = jax.nn.sigmoid(gates[:, 3 * H:])
            c_new = f * c + i * g
            h_new = o * jnp.tanh(c_new)
            h_new = h_new * m
            c_new = c_new * m
            return (h_new, c_new), h_new

        xs = (jnp.transpose(emb, (1, 0, 2)), jnp.transpose(mask)[:, :, None])
        init = (jnp.zeros((B, H), jnp.float32), jnp.zeros((B, H), jnp.float32))
        _, hs = lax.scan(step, init, xs, reverse=reverse)
        return jnp.transpose(hs, (1, 0, 2))                        # [B, L, H]

    h_f = run_dir(wih_f, whh_f, b_f, reverse=False)
    h_b = run_dir(wih_b, whh_b, b_b, reverse=True)
    hid = jnp.concatenate([h_f, h_b], axis=-1)                     # [B, L, 2H]
    emission = hid @ wout + bout                                   # [B, L, T]
    return emission[:, :, None, :] + trans[None, None, :, :]       # [B, L, T, T]


# ----------------------------------------------------------------------------
if __name__ == "__main__":
    # Small, module-consistent shapes.
    vocab_size = 50
    emb_size = 32
    hidden_size = 32
    tag2id = {"B-PER": 0, "I-PER": 1, "B-LOC": 2, "I-LOC": 3, "O": 4,
              "<start>": 5, "<end>": 6, "<pad>": 7}
    out_size = len(tag2id)       # 8
    B, L = 2, 8

    key = jax.random.PRNGKey(0)
    ks = jax.random.split(key, 12)
    scale = 0.1
    emb_table = jax.random.normal(ks[0], (vocab_size, emb_size), jnp.float32) * scale
    wih_f = jax.random.normal(ks[1], (emb_size, 4 * hidden_size), jnp.float32) * scale
    whh_f = jax.random.normal(ks[2], (hidden_size, 4 * hidden_size), jnp.float32) * scale
    b_f = jax.random.normal(ks[3], (1, 4 * hidden_size), jnp.float32) * scale
    wih_b = jax.random.normal(ks[4], (emb_size, 4 * hidden_size), jnp.float32) * scale
    whh_b = jax.random.normal(ks[5], (hidden_size, 4 * hidden_size), jnp.float32) * scale
    b_b = jax.random.normal(ks[6], (1, 4 * hidden_size), jnp.float32) * scale
    wout = jax.random.normal(ks[7], (2 * hidden_size, out_size), jnp.float32) * scale
    bout = jax.random.normal(ks[8], (1, out_size), jnp.float32) * scale
    transition = jnp.ones((out_size, out_size), jnp.float32) / out_size  # as in __init__

    params = (emb_table, wih_f, whh_f, b_f, wih_b, whh_b, b_b, wout, bout, transition)

    sents = jax.random.randint(ks[9], (B, L), 0, vocab_size, dtype=jnp.int32)
    lengths = jnp.array([L, L - 3], dtype=jnp.int32)   # sorted descending, like pack_padded

    crf_scores = bilstm_crf_forward(sents, lengths, params)
    crf_scores = jax.block_until_ready(crf_scores)

    ref = bilstm_crf_reference(sents, lengths, params)
    assert crf_scores.shape == (B, L, out_size, out_size)
    assert jnp.allclose(crf_scores, ref, atol=1e-4, rtol=1e-4), (
        float(jnp.max(jnp.abs(crf_scores - ref))))

    print("KERNEL_OK")
</pallas_src>

<mosaic_0001>
module attributes {stable_mosaic.version = 11 : i64} {
  func.func @_bilstm_dir_kernel(%arg0: i32, %arg1: memref<1x64x32xf32, #tpu.memory_space<vmem>>, %arg2: memref<1x64x1xf32, #tpu.memory_space<vmem>>, %arg3: memref<1x32x128xf32, #tpu.memory_space<vmem>>, %arg4: memref<1x32x128xf32, #tpu.memory_space<vmem>>, %arg5: memref<1x1x128xf32, #tpu.memory_space<vmem>>, %arg6: memref<1x32x8xf32, #tpu.memory_space<vmem>>, %arg7: memref<1x64x8xf32, #tpu.memory_space<vmem>>, %arg8: memref<64x32xf32, #tpu.memory_space<vmem>>) attributes {dimension_semantics = [#tpu.dimension_semantics<parallel>], iteration_bounds = array<i64: 2>, scalar_prefetch = 0 : i64, scratch_operands = 1 : i64, tpu.core_type = #tpu.core_type<tc>, window_params = [{transform_indices = @transform_0, window_bounds = array<i64: 1, 64, 32>}, {transform_indices = @transform_1, window_bounds = array<i64: 1, 64, 1>}, {transform_indices = @transform_2, window_bounds = array<i64: 1, 32, 128>}, {transform_indices = @transform_3, window_bounds = array<i64: 1, 32, 128>}, {transform_indices = @transform_4, window_bounds = array<i64: 1, 1, 128>}, {transform_indices = @transform_5, window_bounds = array<i64: 1, 32, 8>}, {transform_indices = @transform_6, window_bounds = array<i64: 1, 64, 8>}]} {
    %c0 = arith.constant 0 : index
    %c0_0 = arith.constant 0 : index
    %c0_1 = arith.constant 0 : index
    %0 = vector.load %arg3[%c0, %c0_0, %c0_1] : memref<1x32x128xf32, #tpu.memory_space<vmem>>, vector<1x32x128xf32>
    %1 = vector.shape_cast %0 : vector<1x32x128xf32> to vector<32x128xf32>
    %c0_2 = arith.constant 0 : index
    %c0_3 = arith.constant 0 : index
    %c0_4 = arith.constant 0 : index
    %2 = vector.load %arg4[%c0_2, %c0_3, %c0_4] : memref<1x32x128xf32, #tpu.memory_space<vmem>>, vector<1x32x128xf32>
    %3 = vector.shape_cast %2 : vector<1x32x128xf32> to vector<32x128xf32>
    %c0_5 = arith.constant 0 : index
    %c0_6 = arith.constant 0 : index
    %c0_7 = arith.constant 0 : index
    %4 = vector.load %arg5[%c0_5, %c0_6, %c0_7] : memref<1x1x128xf32, #tpu.memory_space<vmem>>, vector<1x1x128xf32>
    %5 = vector.shape_cast %4 : vector<1x1x128xf32> to vector<1x128xf32>
    %c0_8 = arith.constant 0 : index
    %c0_9 = arith.constant 0 : index
    %c0_10 = arith.constant 0 : index
    %6 = vector.load %arg6[%c0_8, %c0_9, %c0_10] : memref<1x32x8xf32, #tpu.memory_space<vmem>>, vector<1x32x8xf32>
    %7 = vector.shape_cast %6 : vector<1x32x8xf32> to vector<32x8xf32>
    %c0_11 = arith.constant 0 : index
    %c0_12 = arith.constant 0 : index
    %c0_13 = arith.constant 0 : index
    %8 = vector.load %arg1[%c0_11, %c0_12, %c0_13] : memref<1x64x32xf32, #tpu.memory_space<vmem>>, vector<1x64x32xf32>
    %9 = vector.shape_cast %8 : vector<1x64x32xf32> to vector<64x32xf32>
    %c0_14 = arith.constant 0 : index
    %c0_15 = arith.constant 0 : index
    %c0_16 = arith.constant 0 : index
    %10 = vector.load %arg2[%c0_14, %c0_15, %c0_16] : memref<1x64x1xf32, #tpu.memory_space<vmem>>, vector<1x64x1xf32>
    %11 = vector.shape_cast %10 : vector<1x64x1xf32> to vector<64x1xf32>
    %cst = arith.constant dense<0.000000e+00> : vector<64x128xf32>
    %12 = tpu.matmul %9, %1, %cst {dimension_numbers = #tpu.dot_dimension_numbers<[1], [0], [0], [1], [0, 0, 1, 1], [], []>} : vector<64x32xf32>, vector<32x128xf32>, vector<64x128xf32> -> vector<64x128xf32>
    %13 = vector.broadcast %5 : vector<1x128xf32> to vector<64x128xf32>
    %14 = arith.addf %12, %13 : vector<64x128xf32>
    %cst_17 = arith.constant 0.000000e+00 : f32
    %15 = vector.broadcast %cst_17 : f32 to vector<8x32xf32>
    %cst_18 = arith.constant 0.000000e+00 : f32
    %16 = vector.broadcast %cst_18 : f32 to vector<8x32xf32>
    %17 = vector.extract_strided_slice %14 {offsets = [0, 0], sizes = [8, 128], strides = [1, 1]} : vector<64x128xf32> to vector<8x128xf32>
    %cst_19 = arith.constant dense<0.000000e+00> : vector<8x128xf32>
    %18 = tpu.matmul %15, %3, %cst_19 {dimension_numbers = #tpu.dot_dimension_numbers<[1], [0], [0], [1], [0, 0, 1, 1], [], []>} : vector<8x32xf32>, vector<32x128xf32>, vector<8x128xf32> -> vector<8x128xf32>
    %19 = arith.addf %17, %18 : vector<8x128xf32>
    %20 = vector.extract_strided_slice %19 {offsets = [0, 0], sizes = [8, 32], strides = [1, 1]} : vector<8x128xf32> to vector<8x32xf32>
    %21 = arith.negf %20 : vector<8x32xf32>
    %22 = math.exp %21 : vector<8x32xf32>
    %cst_20 = arith.constant 1.000000e+00 : f32
    %23 = vector.broadcast %cst_20 : f32 to vector<8x32xf32>
    %24 = arith.addf %23, %22 : vector<8x32xf32>
    %25 = arith.divf %23, %24 : vector<8x32xf32>
    %26 = vector.extract_strided_slice %19 {offsets = [0, 32], sizes = [8, 32], strides = [1, 1]} : vector<8x128xf32> to vector<8x32xf32>
    %27 = arith.negf %26 : vector<8x32xf32>
    %28 = math.exp %27 : vector<8x32xf32>
    %cst_21 = arith.constant 1.000000e+00 : f32
    %29 = vector.broadcast %cst_21 : f32 to vector<8x32xf32>
    %30 = arith.addf %29, %28 : vector<8x32xf32>
    %31 = arith.divf %29, %30 : vector<8x32xf32>
    %32 = vector.extract_strided_slice %19 {offsets = [0, 64], sizes = [8, 32], strides = [1, 1]} : vector<8x128xf32> to vector<8x32xf32>
    %33 = math.tanh %32 : vector<8x32xf32>
    %34 = vector.extract_strided_slice %19 {offsets = [0, 96], sizes = [8, 32], strides = [1, 1]} : vector<8x128xf32> to vector<8x32xf32>
    %35 = arith.negf %34 : vector<8x32xf32>
    %36 = math.exp %35 : vector<8x32xf32>
    %cst_22 = arith.constant 1.000000e+00 : f32
    %37 = vector.broadcast %cst_22 : f32 to vector<8x32xf32>
    %38 = arith.addf %37, %36 : vector<8x32xf32>
    %39 = arith.divf %37, %38 : vector<8x32xf32>
    %40 = arith.mulf %31, %16 : vector<8x32xf32>
    %41 = arith.mulf %25, %33 : vector<8x32xf32>
    %42 = arith.addf %40, %41 : vector<8x32xf32>
    %43 = math.tanh %42 : vector<8x32xf32>
    %44 = arith.mulf %39, %43 : vector<8x32xf32>
    %45 = vector.extract_strided_slice %11 {offsets = [0, 0], sizes = [8, 1], strides = [1, 1]} : vector<64x1xf32> to vector<8x1xf32>
    %46 = vector.broadcast %45 : vector<8x1xf32> to vector<8x32xf32>
    %47 = arith.mulf %44, %46 : vector<8x32xf32>
    %48 = vector.broadcast %45 : vector<8x1xf32> to vector<8x32xf32>
    %49 = arith.mulf %42, %48 : vector<8x32xf32>
    %c0_23 = arith.constant 0 : index
    %c0_24 = arith.constant 0 : index
    %50 = vector.load %arg8[%c0_23, %c0_24] : memref<64x32xf32, #tpu.memory_space<vmem>>, vector<8x32xf32>
    tpu.vector_store %arg8[%c0_23, %c0_24], %47 {strides = array<i32>} : memref<64x32xf32, #tpu.memory_space<vmem>>, vector<8x32xf32>,
    %51 = vector.extract_strided_slice %14 {offsets = [8, 0], sizes = [8, 128], strides = [1, 1]} : vector<64x128xf32> to vector<8x128xf32>
    %cst_25 = arith.constant dense<0.000000e+00> : vector<8x128xf32>
    %52 = tpu.matmul %47, %3, %cst_25 {dimension_numbers = #tpu.dot_dimension_numbers<[1], [0], [0], [1], [0, 0, 1, 1], [], []>} : vector<8x32xf32>, vector<32x128xf32>, vector<8x128xf32> -> vector<8x128xf32>
    %53 = arith.addf %51, %52 : vector<8x128xf32>
    %54 = vector.extract_strided_slice %53 {offsets = [0, 0], sizes = [8, 32], strides = [1, 1]} : vector<8x128xf32> to vector<8x32xf32>
    %55 = arith.negf %54 : vector<8x32xf32>
    %56 = math.exp %55 : vector<8x32xf32>
    %cst_26 = arith.constant 1.000000e+00 : f32
    %57 = vector.broadcast %cst_26 : f32 to vector<8x32xf32>
    %58 = arith.addf %57, %56 : vector<8x32xf32>
    %59 = arith.divf %57, %58 : vector<8x32xf32>
    %60 = vector.extract_strided_slice %53 {offsets = [0, 32], sizes = [8, 32], strides = [1, 1]} : vector<8x128xf32> to vector<8x32xf32>
    %61 = arith.negf %60 : vector<8x32xf32>
    %62 = math.exp %61 : vector<8x32xf32>
    %cst_27 = arith.constant 1.000000e+00 : f32
    %63 = vector.broadcast %cst_27 : f32 to vector<8x32xf32>
    %64 = arith.addf %63, %62 : vector<8x32xf32>
    %65 = arith.divf %63, %64 : vector<8x32xf32>
    %66 = vector.extract_strided_slice %53 {offsets = [0, 64], sizes = [8, 32], strides = [1, 1]} : vector<8x128xf32> to vector<8x32xf32>
    %67 = math.tanh %66 : vector<8x32xf32>
    %68 = vector.extract_strided_slice %53 {offsets = [0, 96], sizes = [8, 32], strides = [1, 1]} : vector<8x128xf32> to vector<8x32xf32>
    %69 = arith.negf %68 : vector<8x32xf32>
    %70 = math.exp %69 : vector<8x32xf32>
    %cst_28 = arith.constant 1.000000e+00 : f32
    %71 = vector.broadcast %cst_28 : f32 to vector<8x32xf32>
    %72 = arith.addf %71, %70 : vector<8x32xf32>
    %73 = arith.divf %71, %72 : vector<8x32xf32>
    %74 = arith.mulf %65, %49 : vector<8x32xf32>
    %75 = arith.mulf %59, %67 : vector<8x32xf32>
    %76 = arith.addf %74, %75 : vector<8x32xf32>
    %77 = math.tanh %76 : vector<8x32xf32>
    %78 = arith.mulf %73, %77 : vector<8x32xf32>
    %79 = vector.extract_strided_slice %11 {offsets = [8, 0], sizes = [8, 1], strides = [1, 1]} : vector<64x1xf32> to vector<8x1xf32>
    %80 = vector.broadcast %79 : vector<8x1xf32> to vector<8x32xf32>
    %81 = arith.mulf %78, %80 : vector<8x32xf32>
    %82 = vector.broadcast %79 : vector<8x1xf32> to vector<8x32xf32>
    %83 = arith.mulf %76, %82 : vector<8x32xf32>
    %c8 = arith.constant 8 : index
    %c0_29 = arith.constant 0 : index
    %84 = vector.load %arg8[%c8, %c0_29] : memref<64x32xf32, #tpu.memory_space<vmem>>, vector<8x32xf32>
    tpu.vector_store %arg8[%c8, %c0_29], %81 {strides = array<i32>} : memref<64x32xf32, #tpu.memory_space<vmem>>, vector<8x32xf32>,
    %85 = vector.extract_strided_slice %14 {offsets = [16, 0], sizes = [8, 128], strides = [1, 1]} : vector<64x128xf32> to vector<8x128xf32>
    %cst_30 = arith.constant dense<0.000000e+00> : vector<8x128xf32>
    %86 = tpu.matmul %81, %3, %cst_30 {dimension_numbers = #tpu.dot_dimension_numbers<[1], [0], [0], [1], [0, 0, 1, 1], [], []>} : vector<8x32xf32>, vector<32x128xf32>, vector<8x128xf32> -> vector<8x128xf32>
    %87 = arith.addf %85, %86 : vector<8x128xf32>
    %88 = vector.extract_strided_slice %87 {offsets = [0, 0], sizes = [8, 32], strides = [1, 1]} : vector<8x128xf32> to vector<8x32xf32>
    %89 = arith.negf %88 : vector<8x32xf32>
    %90 = math.exp %89 : vector<8x32xf32>
    %cst_31 = arith.constant 1.000000e+00 : f32
    %91 = vector.broadcast %cst_31 : f32 to vector<8x32xf32>
    %92 = arith.addf %91, %90 : vector<8x32xf32>
    %93 = arith.divf %91, %92 : vector<8x32xf32>
    %94 = vector.extract_strided_slice %87 {offsets = [0, 32], sizes = [8, 32], strides = [1, 1]} : vector<8x128xf32> to vector<8x32xf32>
    %95 = arith.negf %94 : vector<8x32xf32>
    %96 = math.exp %95 : vector<8x32xf32>
    %cst_32 = arith.constant 1.000000e+00 : f32
    %97 = vector.broadcast %cst_32 : f32 to vector<8x32xf32>
    %98 = arith.addf %97, %96 : vector<8x32xf32>
    %99 = arith.divf %97, %98 : vector<8x32xf32>
    %100 = vector.extract_strided_slice %87 {offsets = [0, 64], sizes = [8, 32], strides = [1, 1]} : vector<8x128xf32> to vector<8x32xf32>
    %101 = math.tanh %100 : vector<8x32xf32>
    %102 = vector.extract_strided_slice %87 {offsets = [0, 96], sizes = [8, 32], strides = [1, 1]} : vector<8x128xf32> to vector<8x32xf32>
    %103 = arith.negf %102 : vector<8x32xf32>
    %104 = math.exp %103 : vector<8x32xf32>
    %cst_33 = arith.constant 1.000000e+00 : f32
    %105 = vector.broadcast %cst_33 : f32 to vector<8x32xf32>
    %106 = arith.addf %105, %104 : vector<8x32xf32>
    %107 = arith.divf %105, %106 : vector<8x32xf32>
    %108 = arith.mulf %99, %83 : vector<8x32xf32>
    %109 = arith.mulf %93, %101 : vector<8x32xf32>
    %110 = arith.addf %108, %109 : vector<8x32xf32>
    %111 = math.tanh %110 : vector<8x32xf32>
    %112 = arith.mulf %107, %111 : vector<8x32xf32>
    %113 = vector.extract_strided_slice %11 {offsets = [16, 0], sizes = [8, 1], strides = [1, 1]} : vector<64x1xf32> to vector<8x1xf32>
    %114 = vector.broadcast %113 : vector<8x1xf32> to vector<8x32xf32>
    %115 = arith.mulf %112, %114 : vector<8x32xf32>
    %116 = vector.broadcast %113 : vector<8x1xf32> to vector<8x32xf32>
    %117 = arith.mulf %110, %116 : vector<8x32xf32>
    %c16 = arith.constant 16 : index
    %c0_34 = arith.constant 0 : index
    %118 = vector.load %arg8[%c16, %c0_34] : memref<64x32xf32, #tpu.memory_space<vmem>>, vector<8x32xf32>
    tpu.vector_store %arg8[%c16, %c0_34], %115 {strides = array<i32>} : memref<64x32xf32, #tpu.memory_space<vmem>>, vector<8x32xf32>,
    %119 = vector.extract_strided_slice %14 {offsets = [24, 0], sizes = [8, 128], strides = [1, 1]} : vector<64x128xf32> to vector<8x128xf32>
    %cst_35 = arith.constant dense<0.000000e+00> : vector<8x128xf32>
    %120 = tpu.matmul %115, %3, %cst_35 {dimension_numbers = #tpu.dot_dimension_numbers<[1], [0], [0], [1], [0, 0, 1, 1], [], []>} : vector<8x32xf32>, vector<32x128xf32>, vector<8x128xf32> -> vector<8x128xf32>
    %121 = arith.addf %119, %120 : vector<8x128xf32>
    %122 = vector.extract_strided_slice %121 {offsets = [0, 0], sizes = [8, 32], strides = [1, 1]} : vector<8x128xf32> to vector<8x32xf32>
    %123 = arith.negf %122 : vector<8x32xf32>
    %124 = math.exp %123 : vector<8x32xf32>
    %cst_36 = arith.constant 1.000000e+00 : f32
    %125 = vector.broadcast %cst_36 : f32 to vector<8x32xf32>
    %126 = arith.addf %125, %124 : vector<8x32xf32>
    %127 = arith.divf %125, %126 : vector<8x32xf32>
    %128 = vector.extract_strided_slice %121 {offsets = [0, 32], sizes = [8, 32], strides = [1, 1]} : vector<8x128xf32> to vector<8x32xf32>
    %129 = arith.negf %128 : vector<8x32xf32>
    %130 = math.exp %129 : vector<8x32xf32>
    %cst_37 = arith.constant 1.000000e+00 : f32
    %131 = vector.broadcast %cst_37 : f32 to vector<8x32xf32>
    %132 = arith.addf %131, %130 : vector<8x32xf32>
    %133 = arith.divf %131, %132 : vector<8x32xf32>
    %134 = vector.extract_strided_slice %121 {offsets = [0, 64], sizes = [8, 32], strides = [1, 1]} : vector<8x128xf32> to vector<8x32xf32>
    %135 = math.tanh %134 : vector<8x32xf32>
    %136 = vector.extract_strided_slice %121 {offsets = [0, 96], sizes = [8, 32], strides = [1, 1]} : vector<8x128xf32> to vector<8x32xf32>
    %137 = arith.negf %136 : vector<8x32xf32>
    %138 = math.exp %137 : vector<8x32xf32>
    %cst_38 = arith.constant 1.000000e+00 : f32
    %139 = vector.broadcast %cst_38 : f32 to vector<8x32xf32>
    %140 = arith.addf %139, %138 : vector<8x32xf32>
    %141 = arith.divf %139, %140 : vector<8x32xf32>
    %142 = arith.mulf %133, %117 : vector<8x32xf32>
    %143 = arith.mulf %127, %135 : vector<8x32xf32>
    %144 = arith.addf %142, %143 : vector<8x32xf32>
    %145 = math.tanh %144 : vector<8x32xf32>
    %146 = arith.mulf %141, %145 : vector<8x32xf32>
    %147 = vector.extract_strided_slice %11 {offsets = [24, 0], sizes = [8, 1], strides = [1, 1]} : vector<64x1xf32> to vector<8x1xf32>
    %148 = vector.broadcast %147 : vector<8x1xf32> to vector<8x32xf32>
    %149 = arith.mulf %146, %148 : vector<8x32xf32>
    %150 = vector.broadcast %147 : vector<8x1xf32> to vector<8x32xf32>
    %151 = arith.mulf %144, %150 : vector<8x32xf32>
    %c24 = arith.constant 24 : index
    %c0_39 = arith.constant 0 : index
    %152 = vector.load %arg8[%c24, %c0_39] : memref<64x32xf32, #tpu.memory_space<vmem>>, vector<8x32xf32>
    tpu.vector_store %arg8[%c24, %c0_39], %149 {strides = array<i32>} : memref<64x32xf32, #tpu.memory_space<vmem>>, vector<8x32xf32>,
    %153 = vector.extract_strided_slice %14 {offsets = [32, 0], sizes = [8, 128], strides = [1, 1]} : vector<64x128xf32> to vector<8x128xf32>
    %cst_40 = arith.constant dense<0.000000e+00> : vector<8x128xf32>
    %154 = tpu.matmul %149, %3, %cst_40 {dimension_numbers = #tpu.dot_dimension_numbers<[1], [0], [0], [1], [0, 0, 1, 1], [], []>} : vector<8x32xf32>, vector<32x128xf32>, vector<8x128xf32> -> vector<8x128xf32>
    %155 = arith.addf %153, %154 : vector<8x128xf32>
    %156 = vector.extract_strided_slice %155 {offsets = [0, 0], sizes = [8, 32], strides = [1, 1]} : vector<8x128xf32> to vector<8x32xf32>
    %157 = arith.negf %156 : vector<8x32xf32>
    %158 = math.exp %157 : vector<8x32xf32>
    %cst_41 = arith.constant 1.000000e+00 : f32
    %159 = vector.broadcast %cst_41 : f32 to vector<8x32xf32>
    %160 = arith.addf %159, %158 : vector<8x32xf32>
    %161 = arith.divf %159, %160 : vector<8x32xf32>
    %162 = vector.extract_strided_slice %155 {offsets = [0, 32], sizes = [8, 32], strides = [1, 1]} : vector<8x128xf32> to vector<8x32xf32>
    %163 = arith.negf %162 : vector<8x32xf32>
    %164 = math.exp %163 : vector<8x32xf32>
    %cst_42 = arith.constant 1.000000e+00 : f32
    %165 = vector.broadcast %cst_42 : f32 to vector<8x32xf32>
    %166 = arith.addf %165, %164 : vector<8x32xf32>
    %167 = arith.divf %165, %166 : vector<8x32xf32>
    %168 = vector.extract_strided_slice %155 {offsets = [0, 64], sizes = [8, 32], strides = [1, 1]} : vector<8x128xf32> to vector<8x32xf32>
    %169 = math.tanh %168 : vector<8x32xf32>
    %170 = vector.extract_strided_slice %155 {offsets = [0, 96], sizes = [8, 32], strides = [1, 1]} : vector<8x128xf32> to vector<8x32xf32>
    %171 = arith.negf %170 : vector<8x32xf32>
    %172 = math.exp %171 : vector<8x32xf32>
    %cst_43 = arith.constant 1.000000e+00 : f32
    %173 = vector.broadcast %cst_43 : f32 to vector<8x32xf32>
    %174 = arith.addf %173, %172 : vector<8x32xf32>
    %175 = arith.divf %173, %174 : vector<8x32xf32>
    %176 = arith.mulf %167, %151 : vector<8x32xf32>
    %177 = arith.mulf %161, %169 : vector<8x32xf32>
    %178 = arith.addf %176, %177 : vector<8x32xf32>
    %179 = math.tanh %178 : vector<8x32xf32>
    %180 = arith.mulf %175, %179 : vector<8x32xf32>
    %181 = vector.extract_strided_slice %11 {offsets = [32, 0], sizes = [8, 1], strides = [1, 1]} : vector<64x1xf32> to vector<8x1xf32>
    %182 = vector.broadcast %181 : vector<8x1xf32> to vector<8x32xf32>
    %183 = arith.mulf %180, %182 : vector<8x32xf32>
    %184 = vector.broadcast %181 : vector<8x1xf32> to vector<8x32xf32>
    %185 = arith.mulf %178, %184 : vector<8x32xf32>
    %c32 = arith.constant 32 : index
    %c0_44 = arith.constant 0 : index
    %186 = vector.load %arg8[%c32, %c0_44] : memref<64x32xf32, #tpu.memory_space<vmem>>, vector<8x32xf32>
    tpu.vector_store %arg8[%c32, %c0_44], %183 {strides = array<i32>} : memref<64x32xf32, #tpu.memory_space<vmem>>, vector<8x32xf32>,
    %187 = vector.extract_strided_slice %14 {offsets = [40, 0], sizes = [8, 128], strides = [1, 1]} : vector<64x128xf32> to vector<8x128xf32>
    %cst_45 = arith.constant dense<0.000000e+00> : vector<8x128xf32>
    %188 = tpu.matmul %183, %3, %cst_45 {dimension_numbers = #tpu.dot_dimension_numbers<[1], [0], [0], [1], [0, 0, 1, 1], [], []>} : vector<8x32xf32>, vector<32x128xf32>, vector<8x128xf32> -> vector<8x128xf32>
    %189 = arith.addf %187, %188 : vector<8x128xf32>
    %190 = vector.extract_strided_slice %189 {offsets = [0, 0], sizes = [8, 32], strides = [1, 1]} : vector<8x128xf32> to vector<8x32xf32>
    %191 = arith.negf %190 : vector<8x32xf32>
    %192 = math.exp %191 : vector<8x32xf32>
    %cst_46 = arith.constant 1.000000e+00 : f32
    %193 = vector.broadcast %cst_46 : f32 to vector<8x32xf32>
    %194 = arith.addf %193, %192 : vector<8x32xf32>
    %195 = arith.divf %193, %194 : vector<8x32xf32>
    %196 = vector.extract_strided_slice %189 {offsets = [0, 32], sizes = [8, 32], strides = [1, 1]} : vector<8x128xf32> to vector<8x32xf32>
    %197 = arith.negf %196 : vector<8x32xf32>
    %198 = math.exp %197 : vector<8x32xf32>
    %cst_47 = arith.constant 1.000000e+00 : f32
    %199 = vector.broadcast %cst_47 : f32 to vector<8x32xf32>
    %200 = arith.addf %199, %198 : vector<8x32xf32>
    %201 = arith.divf %199, %200 : vector<8x32xf32>
    %202 = vector.extract_strided_slice %189 {offsets = [0, 64], sizes = [8, 32], strides = [1, 1]} : vector<8x128xf32> to vector<8x32xf32>
    %203 = math.tanh %202 : vector<8x32xf32>
    %204 = vector.extract_strided_slice %189 {offsets = [0, 96], sizes = [8, 32], strides = [1, 1]} : vector<8x128xf32> to vector<8x32xf32>
    %205 = arith.negf %204 : vector<8x32xf32>
    %206 = math.exp %205 : vector<8x32xf32>
    %cst_48 = arith.constant 1.000000e+00 : f32
    %207 = vector.broadcast %cst_48 : f32 to vector<8x32xf32>
    %208 = arith.addf %207, %206 : vector<8x32xf32>
    %209 = arith.divf %207, %208 : vector<8x32xf32>
    %210 = arith.mulf %201, %185 : vector<8x32xf32>
    %211 = arith.mulf %195, %203 : vector<8x32xf32>
    %212 = arith.addf %210, %211 : vector<8x32xf32>
    %213 = math.tanh %212 : vector<8x32xf32>
    %214 = arith.mulf %209, %213 : vector<8x32xf32>
    %215 = vector.extract_strided_slice %11 {offsets = [40, 0], sizes = [8, 1], strides = [1, 1]} : vector<64x1xf32> to vector<8x1xf32>
    %216 = vector.broadcast %215 : vector<8x1xf32> to vector<8x32xf32>
    %217 = arith.mulf %214, %216 : vector<8x32xf32>
    %218 = vector.broadcast %215 : vector<8x1xf32> to vector<8x32xf32>
    %219 = arith.mulf %212, %218 : vector<8x32xf32>
    %c40 = arith.constant 40 : index
    %c0_49 = arith.constant 0 : index
    %220 = vector.load %arg8[%c40, %c0_49] : memref<64x32xf32, #tpu.memory_space<vmem>>, vector<8x32xf32>
    tpu.vector_store %arg8[%c40, %c0_49], %217 {strides = array<i32>} : memref<64x32xf32, #tpu.memory_space<vmem>>, vector<8x32xf32>,
    %221 = vector.extract_strided_slice %14 {offsets = [48, 0], sizes = [8, 128], strides = [1, 1]} : vector<64x128xf32> to vector<8x128xf32>
    %cst_50 = arith.constant dense<0.000000e+00> : vector<8x128xf32>
    %222 = tpu.matmul %217, %3, %cst_50 {dimension_numbers = #tpu.dot_dimension_numbers<[1], [0], [0], [1], [0, 0, 1, 1], [], []>} : vector<8x32xf32>, vector<32x128xf32>, vector<8x128xf32> -> vector<8x128xf32>
    %223 = arith.addf %221, %222 : vector<8x128xf32>
    %224 = vector.extract_strided_slice %223 {offsets = [0, 0], sizes = [8, 32], strides = [1, 1]} : vector<8x128xf32> to vector<8x32xf32>
    %225 = arith.negf %224 : vector<8x32xf32>
    %226 = math.exp %225 : vector<8x32xf32>
    %cst_51 = arith.constant 1.000000e+00 : f32
    %227 = vector.broadcast %cst_51 : f32 to vector<8x32xf32>
    %228 = arith.addf %227, %226 : vector<8x32xf32>
    %229 = arith.divf %227, %228 : vector<8x32xf32>
    %230 = vector.extract_strided_slice %223 {offsets = [0, 32], sizes = [8, 32], strides = [1, 1]} : vector<8x128xf32> to vector<8x32xf32>
    %231 = arith.negf %230 : vector<8x32xf32>
    %232 = math.exp %231 : vector<8x32xf32>
    %cst_52 = arith.constant 1.000000e+00 : f32
    %233 = vector.broadcast %cst_52 : f32 to vector<8x32xf32>
    %234 = arith.addf %233, %232 : vector<8x32xf32>
    %235 = arith.divf %233, %234 : vector<8x32xf32>
    %236 = vector.extract_strided_slice %223 {offsets = [0, 64], sizes = [8, 32], strides = [1, 1]} : vector<8x128xf32> to vector<8x32xf32>
    %237 = math.tanh %236 : vector<8x32xf32>
    %238 = vector.extract_strided_slice %223 {offsets = [0, 96], sizes = [8, 32], strides = [1, 1]} : vector<8x128xf32> to vector<8x32xf32>
    %239 = arith.negf %238 : vector<8x32xf32>
    %240 = math.exp %239 : vector<8x32xf32>
    %cst_53 = arith.constant 1.000000e+00 : f32
    %241 = vector.broadcast %cst_53 : f32 to vector<8x32xf32>
    %242 = arith.addf %241, %240 : vector<8x32xf32>
    %243 = arith.divf %241, %242 : vector<8x32xf32>
    %244 = arith.mulf %235, %219 : vector<8x32xf32>
    %245 = arith.mulf %229, %237 : vector<8x32xf32>
    %246 = arith.addf %244, %245 : vector<8x32xf32>
    %247 = math.tanh %246 : vector<8x32xf32>
    %248 = arith.mulf %243, %247 : vector<8x32xf32>
    %249 = vector.extract_strided_slice %11 {offsets = [48, 0], sizes = [8, 1], strides = [1, 1]} : vector<64x1xf32> to vector<8x1xf32>
    %250 = vector.broadcast %249 : vector<8x1xf32> to vector<8x32xf32>
    %251 = arith.mulf %248, %250 : vector<8x32xf32>
    %252 = vector.broadcast %249 : vector<8x1xf32> to vector<8x32xf32>
    %253 = arith.mulf %246, %252 : vector<8x32xf32>
    %c48 = arith.constant 48 : index
    %c0_54 = arith.constant 0 : index
    %254 = vector.load %arg8[%c48, %c0_54] : memref<64x32xf32, #tpu.memory_space<vmem>>, vector<8x32xf32>
    tpu.vector_store %arg8[%c48, %c0_54], %251 {strides = array<i32>} : memref<64x32xf32, #tpu.memory_space<vmem>>, vector<8x32xf32>,
    %255 = vector.extract_strided_slice %14 {offsets = [56, 0], sizes = [8, 128], strides = [1, 1]} : vector<64x128xf32> to vector<8x128xf32>
    %cst_55 = arith.constant dense<0.000000e+00> : vector<8x128xf32>
    %256 = tpu.matmul %251, %3, %cst_55 {dimension_numbers = #tpu.dot_dimension_numbers<[1], [0], [0], [1], [0, 0, 1, 1], [], []>} : vector<8x32xf32>, vector<32x128xf32>, vector<8x128xf32> -> vector<8x128xf32>
    %257 = arith.addf %255, %256 : vector<8x128xf32>
    %258 = vector.extract_strided_slice %257 {offsets = [0, 0], sizes = [8, 32], strides = [1, 1]} : vector<8x128xf32> to vector<8x32xf32>
    %259 = arith.negf %258 : vector<8x32xf32>
    %260 = math.exp %259 : vector<8x32xf32>
    %cst_56 = arith.constant 1.000000e+00 : f32
    %261 = vector.broadcast %cst_56 : f32 to vector<8x32xf32>
    %262 = arith.addf %261, %260 : vector<8x32xf32>
    %263 = arith.divf %261, %262 : vector<8x32xf32>
    %264 = vector.extract_strided_slice %257 {offsets = [0, 32], sizes = [8, 32], strides = [1, 1]} : vector<8x128xf32> to vector<8x32xf32>
    %265 = arith.negf %264 : vector<8x32xf32>
    %266 = math.exp %265 : vector<8x32xf32>
    %cst_57 = arith.constant 1.000000e+00 : f32
    %267 = vector.broadcast %cst_57 : f32 to vector<8x32xf32>
    %268 = arith.addf %267, %266 : vector<8x32xf32>
    %269 = arith.divf %267, %268 : vector<8x32xf32>
    %270 = vector.extract_strided_slice %257 {offsets = [0, 64], sizes = [8, 32], strides = [1, 1]} : vector<8x128xf32> to vector<8x32xf32>
    %271 = math.tanh %270 : vector<8x32xf32>
    %272 = vector.extract_strided_slice %257 {offsets = [0, 96], sizes = [8, 32], strides = [1, 1]} : vector<8x128xf32> to vector<8x32xf32>
    %273 = arith.negf %272 : vector<8x32xf32>
    %274 = math.exp %273 : vector<8x32xf32>
    %cst_58 = arith.constant 1.000000e+00 : f32
    %275 = vector.broadcast %cst_58 : f32 to vector<8x32xf32>
    %276 = arith.addf %275, %274 : vector<8x32xf32>
    %277 = arith.divf %275, %276 : vector<8x32xf32>
    %278 = arith.mulf %269, %253 : vector<8x32xf32>
    %279 = arith.mulf %263, %271 : vector<8x32xf32>
    %280 = arith.addf %278, %279 : vector<8x32xf32>
    %281 = math.tanh %280 : vector<8x32xf32>
    %282 = arith.mulf %277, %281 : vector<8x32xf32>
    %283 = vector.extract_strided_slice %11 {offsets = [56, 0], sizes = [8, 1], strides = [1, 1]} : vector<64x1xf32> to vector<8x1xf32>
    %284 = vector.broadcast %283 : vector<8x1xf32> to vector<8x32xf32>
    %285 = arith.mulf %282, %284 : vector<8x32xf32>
    %c56 = arith.constant 56 : index
    %c0_59 = arith.constant 0 : index
    %286 = vector.load %arg8[%c56, %c0_59] : memref<64x32xf32, #tpu.memory_space<vmem>>, vector<8x32xf32>
    tpu.vector_store %arg8[%c56, %c0_59], %285 {strides = array<i32>} : memref<64x32xf32, #tpu.memory_space<vmem>>, vector<8x32xf32>,
    %c0_60 = arith.constant 0 : index
    %c0_61 = arith.constant 0 : index
    %287 = vector.load %arg8[%c0_60, %c0_61] : memref<64x32xf32, #tpu.memory_space<vmem>>, vector<64x32xf32>
    %cst_62 = arith.constant dense<0.000000e+00> : vector<64x8xf32>
    %288 = tpu.matmul %287, %7, %cst_62 {dimension_numbers = #tpu.dot_dimension_numbers<[1], [0], [0], [1], [0, 0, 1, 1], [], []>} : vector<64x32xf32>, vector<32x8xf32>, vector<64x8xf32> -> vector<64x8xf32>
    %c0_63 = arith.constant 0 : index
    %c0_64 = arith.constant 0 : index
    %c0_65 = arith.constant 0 : index
    %289 = vector.load %arg7[%c0_63, %c0_64, %c0_65] : memref<1x64x8xf32, #tpu.memory_space<vmem>>, vector<1x64x8xf32>
    %290 = vector.shape_cast %289 : vector<1x64x8xf32> to vector<64x8xf32>
    %291 = vector.shape_cast %288 : vector<64x8xf32> to vector<1x64x8xf32>
    tpu.vector_store %arg7[%c0_63, %c0_64, %c0_65], %291 {strides = array<i32>} : memref<1x64x8xf32, #tpu.memory_space<vmem>>, vector<1x64x8xf32>,
    return
  }
  func.func @transform_0(%arg0: i32) -> (i32, i32, i32) {
    %c0_i32 = arith.constant 0 : i32
    %c0_i32_0 = arith.constant 0 : i32
    %c0_i32_1 = arith.constant 0 : i32
    return %arg0, %c0_i32, %c0_i32_0 : i32, i32, i32
  }
  func.func @transform_1(%arg0: i32) -> (i32, i32, i32) {
    %c0_i32 = arith.constant 0 : i32
    %c0_i32_0 = arith.constant 0 : i32
    %c0_i32_1 = arith.constant 0 : i32
    return %arg0, %c0_i32, %c0_i32_0 : i32, i32, i32
  }
  func.func @transform_2(%arg0: i32) -> (i32, i32, i32) {
    %c0_i32 = arith.constant 0 : i32
    %c0_i32_0 = arith.constant 0 : i32
    %c0_i32_1 = arith.constant 0 : i32
    return %arg0, %c0_i32, %c0_i32_0 : i32, i32, i32
  }
  func.func @transform_3(%arg0: i32) -> (i32, i32, i32) {
    %c0_i32 = arith.constant 0 : i32
    %c0_i32_0 = arith.constant 0 : i32
    %c0_i32_1 = arith.constant 0 : i32
    return %arg0, %c0_i32, %c0_i32_0 : i32, i32, i32
  }
  func.func @transform_4(%arg0: i32) -> (i32, i32, i32) {
    %c0_i32 = arith.constant 0 : i32
    %c0_i32_0 = arith.constant 0 : i32
    %c0_i32_1 = arith.constant 0 : i32
    return %arg0, %c0_i32, %c0_i32_0 : i32, i32, i32
  }
  func.func @transform_5(%arg0: i32) -> (i32, i32, i32) {
    %c0_i32 = arith.constant 0 : i32
    %c0_i32_0 = arith.constant 0 : i32
    %c0_i32_1 = arith.constant 0 : i32
    return %arg0, %c0_i32, %c0_i32_0 : i32, i32, i32
  }
  func.func @transform_6(%arg0: i32) -> (i32, i32, i32) {
    %c0_i32 = arith.constant 0 : i32
    %c0_i32_0 = arith.constant 0 : i32
    %c0_i32_1 = arith.constant 0 : i32
    return %arg0, %c0_i32, %c0_i32_0 : i32, i32, i32
  }
}

</mosaic_0001>

<llo_original>
// kernel: tpu_custom_call.1
$region0: #{tpu_custom_call.1}
  #allocation0 [shape = 'u32[]', space=smem, size = 0x4, offset = 0x4, fixed_abs, tag = 'smem constant byte address 0x4 - core index']
  #allocation1 [shape = 'u32[144,128]{1,0:T(1,128)}', space=vmem, size = 0x12000, scoped, tag = 'internal scratch']
  #allocation2 [shape = 'f32[64,32]{1,0:T(8,128)}', space=vmem, size = 0x8000, scoped, tag = 'scratch operand']
  %s0 = inlined_call_operand.vmem [shape: f32[2,64,32], index: 0, kind: input, shape index: {}]
  %s1 = inlined_call_operand.vmem [shape: f32[2,64,1], index: 1, kind: input, shape index: {}]
  %s2 = inlined_call_operand.vmem [shape: f32[2,32,128], index: 2, kind: input, shape index: {}]
  %s3 = inlined_call_operand.vmem [shape: f32[2,32,128], index: 3, kind: input, shape index: {}]
  %s4 = inlined_call_operand.vmem [shape: f32[2,1,128], index: 4, kind: input, shape index: {}]
  %s5 = inlined_call_operand.vmem [shape: f32[2,32,8], index: 5, kind: input, shape index: {}]
  %s6 = inlined_call_operand.vmem [shape: f32[2,64,8], index: 6, kind: output, shape index: {}]
  %s7 = sld [smem:[#allocation0]]
  $region57: #{tpu_custom_call.1} parent=0
    _
  %s9 = ssub.s32 1, %s7
  %s10 = scalar_select 0, %s9, %s7
  loop: start=0, step=1, limit=4
  $region2: #{tpu_custom_call.1} parent=0 // loop_pre_header
    _
  $region3: #{tpu_custom_call.1} parent=0 // loop_header
    %s12 = sphi 0, %s16
    %p13 = scmp.ge.s32.totalorder %s12, 4
    %s22 = sphi 0, %s24
    %s25 = sphi 0, %s22
    %s26 = sphi 0, %s25
    %s42 = sphi 0, %s26
    %s48 = sphi 0, %s50
    %s51 = sphi 0, %s48
    %s52 = sphi 0, %s51
    %s68 = sphi 0, %s52
    %s74 = sphi 0, %s76
    %s77 = sphi 0, %s74
    %s78 = sphi 0, %s77
    %s94 = sphi 0, %s78
    %s100 = sphi 0, %s102
    %s103 = sphi 0, %s100
    %s104 = sphi 0, %s103
    %s120 = sphi 0, %s104
    %s126 = sphi 0, %s128
    %s129 = sphi 0, %s126
    %s130 = sphi 0, %s129
    %s146 = sphi 0, %s130
    %s152 = sphi 0, %s154
    %s155 = sphi 0, %s152
    %s156 = sphi 0, %s155
    %s172 = sphi 0, %s156
    %s178 = sphi 0, %s180
    %s181 = sphi 0, %s178
    %s182 = sphi 0, %s181
    %s198 = sphi 0, %s182
  $region4: #{tpu_custom_call.1} parent=0 // loop_header_branch
    %15 = sbr.rel (%p13) target = $region8
  $region5: #{tpu_custom_call.1} parent=0 // loop_body
    %s17 = ssub.s32 %s12, 1
    %s18 = ssub.s32 %s12, 2
    %s19 = sadd.s32 %s12, 1
    %s20 = ssub.s32 %s12, %s19
    %p21 = scmp.eq.s32.totalorder %s20, 0
    %s23 = sadd.s32 %s22, 1
    %s24 = scalar_select %p21, %s22, %s23
    %p27 = pneg %p21
    %p28 = scmp.eq.s32.totalorder %s12, 1
    %p29 = por %p27, %p28
    %p30 = scmp.ne.s32.totalorder %s22, %s25
    %p31 = scmp.eq.s32.totalorder %s12, 0
    %p32 = por %p30, %p31
    %p33 = scmp.ne.s32.totalorder %s22, %s25
    %p34 = scmp.eq.s32.totalorder %s17, 1
    %p35 = por %p33, %p34
    %p36 = scmp.ne.s32.totalorder %s25, %s26
    %p37 = scmp.eq.s32.totalorder %s17, 0
    %p38 = por %p36, %p37
    %p39 = scmp.ne.s32.totalorder %s25, %s26
    %p40 = scmp.eq.s32.totalorder %s18, 1
    %p41 = por %p39, %p40
    %p43 = scmp.ne.s32.totalorder %s26, %s42
    %p44 = scmp.eq.s32.totalorder %s18, 0
    %p45 = por %p43, %p44
    %s46 = ssub.s32 %s12, %s19
    %p47 = scmp.eq.s32.totalorder %s46, 0
    %s49 = sadd.s32 %s48, 1
    %s50 = scalar_select %p47, %s48, %s49
    %p53 = pneg %p47
    %p54 = scmp.eq.s32.totalorder %s12, 1
    %p55 = por %p53, %p54
    %p56 = scmp.ne.s32.totalorder %s48, %s51
    %p57 = scmp.eq.s32.totalorder %s12, 0
    %p58 = por %p56, %p57
    %p59 = scmp.ne.s32.totalorder %s48, %s51
    %p60 = scmp.eq.s32.totalorder %s17, 1
    %p61 = por %p59, %p60
    %p62 = scmp.ne.s32.totalorder %s51, %s52
    %p63 = scmp.eq.s32.totalorder %s17, 0
    %p64 = por %p62, %p63
    %p65 = scmp.ne.s32.totalorder %s51, %s52
    %p66 = scmp.eq.s32.totalorder %s18, 1
    %p67 = por %p65, %p66
    %p69 = scmp.ne.s32.totalorder %s52, %s68
    %p70 = scmp.eq.s32.totalorder %s18, 0
    %p71 = por %p69, %p70
    %s72 = ssub.s32 %s12, %s19
    %p73 = scmp.eq.s32.totalorder %s72, 0
    %s75 = sadd.s32 %s74, 1
    %s76 = scalar_select %p73, %s74, %s75
    %p79 = pneg %p73
    %p80 = scmp.eq.s32.totalorder %s12, 1
    %p81 = por %p79, %p80
    %p82 = scmp.ne.s32.totalorder %s74, %s77
    %p83 = scmp.eq.s32.totalorder %s12, 0
    %p84 = por %p82, %p83
    %p85 = scmp.ne.s32.totalorder %s74, %s77
    %p86 = scmp.eq.s32.totalorder %s17, 1
    %p87 = por %p85, %p86
    %p88 = scmp.ne.s32.totalorder %s77, %s78
    %p89 = scmp.eq.s32.totalorder %s17, 0
    %p90 = por %p88, %p89
    %p91 = scmp.ne.s32.totalorder %s77, %s78
    %p92 = scmp.eq.s32.totalorder %s18, 1
    %p93 = por %p91, %p92
    %p95 = scmp.ne.s32.totalorder %s78, %s94
    %p96 = scmp.eq.s32.totalorder %s18, 0
    %p97 = por %p95, %p96
    %s98 = ssub.s32 %s12, %s19
    %p99 = scmp.eq.s32.totalorder %s98, 0
    %s101 = sadd.s32 %s100, 1
    %s102 = scalar_select %p99, %s100, %s101
    %p105 = pneg %p99
    %p106 = scmp.eq.s32.totalorder %s12, 1
    %p107 = por %p105, %p106
    %p108 = scmp.ne.s32.totalorder %s100, %s103
    %p109 = scmp.eq.s32.totalorder %s12, 0
    %p110 = por %p108, %p109
    %p111 = scmp.ne.s32.totalorder %s100, %s103
    %p112 = scmp.eq.s32.totalorder %s17, 1
    %p113 = por %p111, %p112
    %p114 = scmp.ne.s32.totalorder %s103, %s104
    %p115 = scmp.eq.s32.totalorder %s17, 0
    %p116 = por %p114, %p115
    %p117 = scmp.ne.s32.totalorder %s103, %s104
    %p118 = scmp.eq.s32.totalorder %s18, 1
    %p119 = por %p117, %p118
    %p121 = scmp.ne.s32.totalorder %s104, %s120
    %p122 = scmp.eq.s32.totalorder %s18, 0
    %p123 = por %p121, %p122
    %s124 = ssub.s32 %s12, %s19
    %p125 = scmp.eq.s32.totalorder %s124, 0
    %s127 = sadd.s32 %s126, 1
    %s128 = scalar_select %p125, %s126, %s127
    %p131 = pneg %p125
    %p132 = scmp.eq.s32.totalorder %s12, 1
    %p133 = por %p131, %p132
    %p134 = scmp.ne.s32.totalorder %s126, %s129
    %p135 = scmp.eq.s32.totalorder %s12, 0
    %p136 = por %p134, %p135
    %p137 = scmp.ne.s32.totalorder %s126, %s129
    %p138 = scmp.eq.s32.totalorder %s17, 1
    %p139 = por %p137, %p138
    %p140 = scmp.ne.s32.totalorder %s129, %s130
    %p141 = scmp.eq.s32.totalorder %s17, 0
    %p142 = por %p140, %p141
    %p143 = scmp.ne.s32.totalorder %s129, %s130
    %p144 = scmp.eq.s32.totalorder %s18, 1
    %p145 = por %p143, %p144
    %p147 = scmp.ne.s32.totalorder %s130, %s146
    %p148 = scmp.eq.s32.totalorder %s18, 0
    %p149 = por %p147, %p148
    %s150 = ssub.s32 %s12, %s19
    %p151 = scmp.eq.s32.totalorder %s150, 0
    %s153 = sadd.s32 %s152, 1
    %s154 = scalar_select %p151, %s152, %s153
    %p157 = pneg %p151
    %p158 = scmp.eq.s32.totalorder %s12, 1
    %p159 = por %p157, %p158
    %p160 = scmp.ne.s32.totalorder %s152, %s155
    %p161 = scmp.eq.s32.totalorder %s12, 0
    %p162 = por %p160, %p161
    %p163 = scmp.ne.s32.totalorder %s152, %s155
    %p164 = scmp.eq.s32.totalorder %s17, 1
    %p165 = por %p163, %p164
    %p166 = scmp.ne.s32.totalorder %s155, %s156
    %p167 = scmp.eq.s32.totalorder %s17, 0
    %p168 = por %p166, %p167
    %p169 = scmp.ne.s32.totalorder %s155, %s156
    %p170 = scmp.eq.s32.totalorder %s18, 1
    %p171 = por %p169, %p170
    %p173 = scmp.ne.s32.totalorder %s156, %s172
    %p174 = scmp.eq.s32.totalorder %s18, 0
    %p175 = por %p173, %p174
    %s176 = ssub.s32 %s12, %s19
    %p177 = scmp.eq.s32.totalorder %s176, 0
    %s179 = sadd.s32 %s178, 1
    %s180 = scalar_select %p177, %s178, %s179
    %p183 = pneg %p177
    %p184 = scmp.eq.s32.totalorder %s12, 1
    %p185 = por %p183, %p184
    %p186 = scmp.ne.s32.totalorder %s178, %s181
    %p187 = scmp.eq.s32.totalorder %s12, 0
    %p188 = por %p186, %p187
    %p189 = scmp.ne.s32.totalorder %s178, %s181
    %p190 = scmp.eq.s32.totalorder %s17, 1
    %p191 = por %p189, %p190
    %p192 = scmp.ne.s32.totalorder %s181, %s182
    %p193 = scmp.eq.s32.totalorder %s17, 0
    %p194 = por %p192, %p193
    %p195 = scmp.ne.s32.totalorder %s181, %s182
    %p196 = scmp.eq.s32.totalorder %s18, 1
    %p197 = por %p195, %p196
    %p199 = scmp.ne.s32.totalorder %s182, %s198
    %p200 = scmp.eq.s32.totalorder %s18, 0
    %p201 = por %p199, %p200
    %p202 = scmp.le.s32.totalorder 1, %s12
    %p203 = scmp.lt.s32.totalorder %s12, 3
    %p204 = pnand %p202, %p203
    %p205 = pneg %p204
    // Predicated region
    $region9: #{tpu_custom_call.1} parent=5 // pred_check
      _
    $region10: #{tpu_custom_call.1} parent=5 // pred_check_branch
      %207 = sbr.rel (%p204) target = $region12
    $region11: #{tpu_custom_call.1} parent=5 // pred_region
      %s208 = ssub.s32 %s12, 1
    $region12: #{tpu_custom_call.1} parent=5 // pred_fallthru
      _
    %p209 = scmp.lt.s32.totalorder %s12, 2
    // Predicated region
    $region13: #{tpu_custom_call.1} parent=5 // pred_check
      %p210 = pneg %p209
    $region14: #{tpu_custom_call.1} parent=5 // pred_check_branch
      %212 = sbr.rel (%p210) target = $region16
    $region15: #{tpu_custom_call.1} parent=5 // pred_region
      // Predicated region
      $region17: #{tpu_custom_call.1} parent=15 // pred_check
        %p213 = pneg %p32
      $region18: #{tpu_custom_call.1} parent=15 // pred_check_branch
        %215 = sbr.rel (%p213) target = $region20
      $region19: #{tpu_custom_call.1} parent=15 // pred_region
        %p216 = scmp.lt.s32.totalorder %s12, 1
        %s217 = scalar_select %p216, %s12, 1
        %s218 = smul.addr %s217, 8
        %s219 = smul.addr %s218, 8
        %s220 = scalar_lea.vmem %s0, %s219
      $region20: #{tpu_custom_call.1} parent=15 // pred_fallthru
        _
      // Predicated region
      $region21: #{tpu_custom_call.1} parent=15 // pred_check
        %p221 = pneg %p58
      $region22: #{tpu_custom_call.1} parent=15 // pred_check_branch
        %223 = sbr.rel (%p221) target = $region24
      $region23: #{tpu_custom_call.1} parent=15 // pred_region
        %p224 = scmp.lt.s32.totalorder %s12, 1
        %s225 = scalar_select %p224, %s12, 1
        %s226 = smul.addr %s225, 8
        %s227 = smul.addr %s226, 8
        %s228 = scalar_lea.vmem %s1, %s227
      $region24: #{tpu_custom_call.1} parent=15 // pred_fallthru
        _
      // Predicated region
      $region25: #{tpu_custom_call.1} parent=15 // pred_check
        %p229 = pneg %p84
      $region26: #{tpu_custom_call.1} parent=15 // pred_check_branch
        %231 = sbr.rel (%p229) target = $region28
      $region27: #{tpu_custom_call.1} parent=15 // pred_region
        %p232 = scmp.lt.s32.totalorder %s12, 1
        %s233 = scalar_select %p232, %s12, 1
        %s234 = smul.addr %s233, 4
        %s235 = smul.addr %s234, 8
        %s236 = scalar_lea.vmem %s2, %s235
      $region28: #{tpu_custom_call.1} parent=15 // pred_fallthru
        _
      // Predicated region
      $region29: #{tpu_custom_call.1} parent=15 // pred_check
        %p237 = pneg %p110
      $region30: #{tpu_custom_call.1} parent=15 // pred_check_branch
        %239 = sbr.rel (%p237) target = $region32
      $region31: #{tpu_custom_call.1} parent=15 // pred_region
        %p240 = scmp.lt.s32.totalorder %s12, 1
        %s241 = scalar_select %p240, %s12, 1
        %s242 = smul.addr %s241, 4
        %s243 = smul.addr %s242, 8
        %s244 = scalar_lea.vmem %s3, %s243
      $region32: #{tpu_custom_call.1} parent=15 // pred_fallthru
        _
      // Predicated region
      $region33: #{tpu_custom_call.1} parent=15 // pred_check
        %p245 = pneg %p136
      $region34: #{tpu_custom_call.1} parent=15 // pred_check_branch
        %247 = sbr.rel (%p245) target = $region36
      $region35: #{tpu_custom_call.1} parent=15 // pred_region
        %p248 = scmp.lt.s32.totalorder %s12, 1
        %s249 = scalar_select %p248, %s12, 1
        %s250 = scalar_lea.vmem %s4, %s249
      $region36: #{tpu_custom_call.1} parent=15 // pred_fallthru
        _
      // Predicated region
      $region37: #{tpu_custom_call.1} parent=15 // pred_check
        %p251 = pneg %p162
      $region38: #{tpu_custom_call.1} parent=15 // pred_check_branch
        %253 = sbr.rel (%p251) target = $region40
      $region39: #{tpu_custom_call.1} parent=15 // pred_region
        %p254 = scmp.lt.s32.totalorder %s12, 1
        %s255 = scalar_select %p254, %s12, 1
        %s256 = smul.addr %s255, 4
        %s257 = smul.addr %s256, 8
        %s258 = scalar_lea.vmem %s5, %s257
      $region40: #{tpu_custom_call.1} parent=15 // pred_fallthru
        _
    $region16: #{tpu_custom_call.1} parent=5 // pred_fallthru
      _
    %p259 = scmp.le.s32.totalorder 1, %s12
    %p260 = scmp.lt.s32.totalorder %s12, 3
    %p261 = pnand %p259, %p260
    %p262 = pneg %p261
    // Predicated region
    $region41: #{tpu_custom_call.1} parent=5 // pred_check
      _
    $region42: #{tpu_custom_call.1} parent=5 // pred_check_branch
      %264 = sbr.rel (%p261) target = $region44
    $region43: #{tpu_custom_call.1} parent=5 // pred_region
      %s265 = ssub.s32 %s12, 1
      %p266 = scmp.lt.s32.totalorder %s17, 1
      %s267 = scalar_select %p266, %s17, 1
      %s268 = smul.addr %s267, 8
      %s269 = smul.addr %s268, 8
      %s270 = scalar_lea.vmem %s0, %s269
      %p271 = pneg %p38
      %p272 = pneg %p35
      %p273 = scmp.lt.s32.totalorder %s17, 1
      %s274 = scalar_select %p273, %s17, 1
      %s275 = smul.addr %s274, 8
      %s276 = smul.addr %s275, 8
      %s277 = scalar_lea.vmem %s1, %s276
      %p278 = pneg %p64
      %p279 = pneg %p61
      %p280 = scmp.lt.s32.totalorder %s17, 1
      %s281 = scalar_select %p280, %s17, 1
      %s282 = smul.addr %s281, 4
      %s283 = smul.addr %s282, 8
      %s284 = scalar_lea.vmem %s2, %s283
      %p285 = pneg %p90
      %p286 = pneg %p87
      %p287 = scmp.lt.s32.totalorder %s17, 1
      %s288 = scalar_select %p287, %s17, 1
      %s289 = smul.addr %s288, 4
      %s290 = smul.addr %s289, 8
      %s291 = scalar_lea.vmem %s3, %s290
      %p292 = pneg %p116
      %p293 = pneg %p113
      %p294 = scmp.lt.s32.totalorder %s17, 1
      %s295 = scalar_select %p294, %s17, 1
      %s296 = scalar_lea.vmem %s4, %s295
      %p297 = pneg %p142
      %p298 = pneg %p139
      %p299 = scmp.lt.s32.totalorder %s17, 1
      %s300 = scalar_select %p299, %s17, 1
      %s301 = smul.addr %s300, 4
      %s302 = smul.addr %s301, 8
      %s303 = scalar_lea.vmem %s5, %s302
      %p304 = pneg %p168
      %p305 = pneg %p165
      %p306 = pneg %p194
      %p307 = pneg %p191
      %p308 = scmp.lt.s32.totalorder %s17, 1
      %s309 = scalar_select %p308, %s17, 1
      %s310 = smul.addr %s309, 8
      %s311 = smul.addr %s310, 8
      %s312 = scalar_lea.vmem %s6, %s311
      %p313 = scmp.lt.s32.totalorder %s17, 1
      %s314 = scalar_select %p313, %s17, 1
      %s315 = smul.addr %s314, 8
      %s316 = smul.addr %s315, 8
      %s317 = scalar_lea.vmem %s0, %s316
      %p318 = scmp.lt.s32.totalorder %s17, 1
      %s319 = scalar_select %p318, %s17, 1
      %s320 = smul.addr %s319, 8
      %s321 = smul.addr %s320, 8
      %s322 = scalar_lea.vmem %s1, %s321
      %p323 = scmp.lt.s32.totalorder %s17, 1
      %s324 = scalar_select %p323, %s17, 1
      %s325 = smul.addr %s324, 4
      %s326 = smul.addr %s325, 8
      %s327 = scalar_lea.vmem %s2, %s326
      %p328 = scmp.lt.s32.totalorder %s17, 1
      %s329 = scalar_select %p328, %s17, 1
      %s330 = smul.addr %s329, 4
      %s331 = smul.addr %s330, 8
      %s332 = scalar_lea.vmem %s3, %s331
      %p333 = scmp.lt.s32.totalorder %s17, 1
      %s334 = scalar_select %p333, %s17, 1
      %s335 = scalar_lea.vmem %s4, %s334
      %p336 = scmp.lt.s32.totalorder %s17, 1
      %s337 = scalar_select %p336, %s17, 1
      %s338 = smul.addr %s337, 4
      %s339 = smul.addr %s338, 8
      %s340 = scalar_lea.vmem %s5, %s339
      %p341 = scmp.lt.s32.totalorder %s17, 1
      %s342 = scalar_select %p341, %s17, 1
      %s343 = smul.addr %s342, 8
      %s344 = smul.addr %s343, 8
      %s345 = scalar_lea.vmem %s6, %s344
      %v346 = vld [vmem:[%s327] sm:$0xff]
      %v347 = vld [vmem:[%s327 + $0x8] sm:$0xff]
      %v348 = vld [vmem:[%s327 + $0x10] sm:$0xff]
      %v349 = vld [vmem:[%s327 + $0x18] sm:$0xff]
      %v350 = vld [vmem:[%s332] sm:$0xff]
      %v351 = vld [vmem:[%s332 + $0x8] sm:$0xff]
      %v352 = vld [vmem:[%s332 + $0x10] sm:$0xff]
      %v353 = vld [vmem:[%s332 + $0x18] sm:$0xff]
      %v354 = vld [vmem:[%s335] sm:$0x1]
      %v355 = vld [vmem:[%s340] sm:$0xff]
      %v356 = vld [vmem:[%s340 + $0x8] sm:$0xff]
      %v357 = vld [vmem:[%s340 + $0x10] sm:$0xff]
      %v358 = vld [vmem:[%s340 + $0x18] sm:$0xff]
      %v359 = vld [vmem:[%s317] sm:$0xff]
      %v360 = vld [vmem:[%s317 + $0x8] sm:$0xff]
      %v361 = vld [vmem:[%s317 + $0x10] sm:$0xff]
      %v362 = vld [vmem:[%s317 + $0x18] sm:$0xff]
      %v363 = vld [vmem:[%s317 + $0x20] sm:$0xff]
      %v364 = vld [vmem:[%s317 + $0x28] sm:$0xff]
      %v365 = vld [vmem:[%s317 + $0x30] sm:$0xff]
      %v366 = vld [vmem:[%s317 + $0x38] sm:$0xff]
      %v367 = vld [vmem:[%s322] sm:$0xff]
      %v368 = vld [vmem:[%s322 + $0x8] sm:$0xff]
      %v369 = vld [vmem:[%s322 + $0x10] sm:$0xff]
      %v370 = vld [vmem:[%s322 + $0x18] sm:$0xff]
      %v371 = vld [vmem:[%s322 + $0x20] sm:$0xff]
      %v372 = vld [vmem:[%s322 + $0x28] sm:$0xff]
      %v373 = vld [vmem:[%s322 + $0x30] sm:$0xff]
      %v374 = vld [vmem:[%s322 + $0x38] sm:$0xff]
      %v376 = vlaneseq
      %v377 = vshrl.u32 %v376, 7
      %v378 = vsub.s32 0, %v377
      %v379 = vrot.slane %v354, %v378
      %vm381 = vcmask 261120
      %v383 = vsel %vm381, %v359, 0
      %v386 = vsel %vm381, %v360, 0
      %v389 = vsel %vm381, %v361, 0
      %v392 = vsel %vm381, %v362, 0
      %v395 = vsel %vm381, %v363, 0
      %v398 = vsel %vm381, %v364, 0
      %v401 = vsel %vm381, %v365, 0
      %v404 = vsel %vm381, %v366, 0
      %406 = vmatprep.subr.mxu0 0.0
      %407 = vmatpush1.msra.mxu0 0.0
      %408 = vmatprep.subr.mxu0 0.0
      %409 = vmatpush1.msra.mxu0 0.0
      %410 = vmatprep.subr.mxu0 0.0
      %411 = vmatpush1.msra.mxu0 0.0
      %412 = vmatprep.subr.mxu0 0.0
      %413 = vmatpush1.msra.mxu0 0.0
      %414 = vmatprep.subr.mxu0 0.0
      %415 = vmatpush1.msra.mxu0 0.0
      %416 = vmatprep.subr.mxu0 0.0
      %417 = vmatpush1.msra.mxu0 0.0
      %418 = vmatprep.subr.mxu0 0.0
      %419 = vmatpush1.msra.mxu0 0.0
      %420 = vmatprep.subr.mxu0 0.0
      %421 = vmatpush1.msra.mxu0 0.0
      %422 = vmatprep.subr.mxu0 0.0
      %423 = vmatpush1.msra.mxu0 0.0
      %424 = vmatprep.subr.mxu0 0.0
      %425 = vmatpush1.msra.mxu0 0.0
      %426 = vmatprep.subr.mxu0 0.0
      %427 = vmatpush1.msra.mxu0 0.0
      %428 = vmatprep.subr.mxu0 0.0
      %429 = vmatpush1.msra.mxu0 0.0
      %430 = vmatprep.subr.mxu0 0.0
      %431 = vmatpush1.msra.mxu0 %v349
      %432 = vmatprep.subr.mxu0 0.0
      %433 = vmatpush1.msra.mxu0 %v348
      %434 = vmatprep.subr.mxu0 0.0
      %435 = vmatpush1.msra.mxu0 %v347
      %436 = vmatprep.subr.mxu0 0.0
      %437 = vmatpush1.msra.mxu0 %v346
      %438 = vmatprep.subr.mxu0 0.0
      %439 = vmatpush2.msra.mxu0 0.0
      %440 = vmatprep.subr.mxu0 0.0
      %441 = vmatpush2.msra.mxu0 0.0
      %442 = vmatprep.subr.mxu0 0.0
      %443 = vmatpush2.msra.mxu0 0.0
      %444 = vmatprep.subr.mxu0 0.0
      %445 = vmatpush2.msra.mxu0 0.0
      %446 = vmatprep.subr.mxu0 0.0
      %447 = vmatpush2.msra.mxu0 0.0
      %448 = vmatprep.subr.mxu0 0.0
      %449 = vmatpush2.msra.mxu0 0.0
      %450 = vmatprep.subr.mxu0 0.0
      %451 = vmatpush2.msra.mxu0 0.0
      %452 = vmatprep.subr.mxu0 0.0
      %453 = vmatpush2.msra.mxu0 0.0
      %454 = vmatprep.subr.mxu0 0.0
      %455 = vmatpush2.msra.mxu0 0.0
      %456 = vmatprep.subr.mxu0 0.0
      %457 = vmatpush2.msra.mxu0 0.0
      %458 = vmatprep.subr.mxu0 0.0
      %459 = vmatpush2.msra.mxu0 0.0
      %460 = vmatprep.subr.mxu0 0.0
      %461 = vmatpush2.msra.mxu0 0.0
      %462 = vmatprep.subr.mxu0 0.0
      %463 = vmatpush2.msra.mxu0 0.0
      %464 = vmatprep.subr.mxu0 0.0
      %465 = vmatpush2.msra.mxu0 0.0
      %466 = vmatprep.subr.mxu0 0.0
      %467 = vmatpush2.msra.mxu0 0.0
      %468 = vmatprep.subr.mxu0 0.0
      %469 = vmatpush2.msra.mxu0 0.0
      %470 = vmatprep.mubr.f32.mxu0 0.0
      %471 = vmatmul.mubr.f32.gmra.mxu0 %v383
      %v472 = vpop.f32.mrf.mxu0
      %v473 = vadd.f32 %v379, %v472
      %v474 = vpop.f32.mrf.mxu0
      %475 = vmatprep.mubr.f32.mxu0 0.0
      %476 = vmatmul.mubr.f32.gmra.mxu0 %v386
      %v477 = vpop.f32.mrf.mxu0
      %v478 = vadd.f32 %v379, %v477
      %v479 = vpop.f32.mrf.mxu0
      %480 = vmatprep.mubr.f32.mxu0 0.0
      %481 = vmatmul.mubr.f32.gmra.mxu0 %v389
      %v482 = vpop.f32.mrf.mxu0
      %v483 = vadd.f32 %v379, %v482
      %v484 = vpop.f32.mrf.mxu0
      %485 = vmatprep.mubr.f32.mxu0 0.0
      %486 = vmatmul.mubr.f32.gmra.mxu0 %v392
      %v487 = vpop.f32.mrf.mxu0
      %v488 = vadd.f32 %v379, %v487
      %v489 = vpop.f32.mrf.mxu0
      %490 = vmatprep.mubr.f32.mxu0 0.0
      %491 = vmatmul.mubr.f32.gmra.mxu0 %v395
      %v492 = vpop.f32.mrf.mxu0
      %v493 = vadd.f32 %v379, %v492
      %v494 = vpop.f32.mrf.mxu0
      %495 = vmatprep.mubr.f32.mxu0 0.0
      %496 = vmatmul.mubr.f32.gmra.mxu0 %v398
      %v497 = vpop.f32.mrf.mxu0
      %v498 = vadd.f32 %v379, %v497
      %v499 = vpop.f32.mrf.mxu0
      %500 = vmatprep.mubr.f32.mxu0 0.0
      %501 = vmatmul.mubr.f32.gmra.mxu0 %v401
      %v502 = vpop.f32.mrf.mxu0
      %v503 = vadd.f32 %v379, %v502
      %v504 = vpop.f32.mrf.mxu0
      %505 = vmatprep.mubr.f32.mxu0 0.0
      %506 = vmatmul.mubr.f32.gmra.mxu0 %v404
      %v507 = vpop.f32.mrf.mxu0
      %v508 = vadd.f32 %v379, %v507
      %v509 = vpop.f32.mrf.mxu0
      %510 = vdwg.mxu0
      %v512 = vsel %vm381, 0.0, 0
      %514 = vmatprep.subr.mxu0 0.0
      %515 = vmatpush1.msra.mxu0 0.0
      %516 = vmatprep.subr.mxu0 0.0
      %517 = vmatpush1.msra.mxu0 0.0
      %518 = vmatprep.subr.mxu0 0.0
      %519 = vmatpush1.msra.mxu0 0.0
      %520 = vmatprep.subr.mxu0 0.0
      %521 = vmatpush1.msra.mxu0 0.0
      %522 = vmatprep.subr.mxu0 0.0
      %523 = vmatpush1.msra.mxu0 0.0
      %524 = vmatprep.subr.mxu0 0.0
      %525 = vmatpush1.msra.mxu0 0.0
      %526 = vmatprep.subr.mxu0 0.0
      %527 = vmatpush1.msra.mxu0 0.0
      %528 = vmatprep.subr.mxu0 0.0
      %529 = vmatpush1.msra.mxu0 0.0
      %530 = vmatprep.subr.mxu0 0.0
      %531 = vmatpush1.msra.mxu0 0.0
      %532 = vmatprep.subr.mxu0 0.0
      %533 = vmatpush1.msra.mxu0 0.0
      %534 = vmatprep.subr.mxu0 0.0
      %535 = vmatpush1.msra.mxu0 0.0
      %536 = vmatprep.subr.mxu0 0.0
      %537 = vmatpush1.msra.mxu0 0.0
      %538 = vmatprep.subr.mxu0 0.0
      %539 = vmatpush1.msra.mxu0 %v353
      %540 = vmatprep.subr.mxu0 0.0
      %541 = vmatpush1.msra.mxu0 %v352
      %542 = vmatprep.subr.mxu0 0.0
      %543 = vmatpush1.msra.mxu0 %v351
      %544 = vmatprep.subr.mxu0 0.0
      %545 = vmatpush1.msra.mxu0 %v350
      %546 = vmatprep.subr.mxu0 0.0
      %547 = vmatpush2.msra.mxu0 0.0
      %548 = vmatprep.subr.mxu0 0.0
      %549 = vmatpush2.msra.mxu0 0.0
      %550 = vmatprep.subr.mxu0 0.0
      %551 = vmatpush2.msra.mxu0 0.0
      %552 = vmatprep.subr.mxu0 0.0
      %553 = vmatpush2.msra.mxu0 0.0
      %554 = vmatprep.subr.mxu0 0.0
      %555 = vmatpush2.msra.mxu0 0.0
      %556 = vmatprep.subr.mxu0 0.0
      %557 = vmatpush2.msra.mxu0 0.0
      %558 = vmatprep.subr.mxu0 0.0
      %559 = vmatpush2.msra.mxu0 0.0
      %560 = vmatprep.subr.mxu0 0.0
      %561 = vmatpush2.msra.mxu0 0.0
      %562 = vmatprep.subr.mxu0 0.0
      %563 = vmatpush2.msra.mxu0 0.0
      %564 = vmatprep.subr.mxu0 0.0
      %565 = vmatpush2.msra.mxu0 0.0
      %566 = vmatprep.subr.mxu0 0.0
      %567 = vmatpush2.msra.mxu0 0.0
      %568 = vmatprep.subr.mxu0 0.0
      %569 = vmatpush2.msra.mxu0 0.0
      %570 = vmatprep.subr.mxu0 0.0
      %571 = vmatpush2.msra.mxu0 0.0
      %572 = vmatprep.subr.mxu0 0.0
      %573 = vmatpush2.msra.mxu0 0.0
      %574 = vmatprep.subr.mxu0 0.0
      %575 = vmatpush2.msra.mxu0 0.0
      %576 = vmatprep.subr.mxu0 0.0
      %577 = vmatpush2.msra.mxu0 0.0
      %578 = vmatprep.mubr.f32.mxu0 0.0
      %579 = vmatmul.mubr.f32.gmra.mxu0 %v512
      %v580 = vpop.f32.mrf.mxu0
      %v581 = vadd.f32 0.0, %v580
      %v582 = vpop.f32.mrf.mxu0
      %583 = vdwg.mxu0
      %v584 = vadd.f32 %v473, %v581
      %v585 = vxor.u32 %v584, 2147483648
      %v586 = vmul.f32 %v585, 1.442695
      %v587 = vpow.pop %v586
      %v588 = vadd.f32 %v587, 1.0
      %v589 = vrcp.pop %v588
      %v590 = vmul.f32 1.0, %v589
      %v591 = vtanh.pop %v584
      %v592 = vmul.f32 %v590, 0.0
      %594 = vrot.lane.b32.xlu0 %v591, 64
      %v595 = vpop.permute.xlu0 %594
      %v597 = vmul.f32 %v590, %v595
      %599 = vrot.lane.b32.xlu0 %v597, 32
      %v600 = vpop.permute.xlu0 %599
      %v602 = vadd.f32 %v592, %v600
      %v603 = vtanh.pop %v602
      %605 = vrot.lane.b32.xlu0 %v603, 64
      %v606 = vpop.permute.xlu0 %605
      %v608 = vmul.f32 %v590, %v606
      %610 = vset.pattern.permute.xlu0 0
      %611 = vperm.xlu0 %610, %v367
      %v612 = vpop.permute.xlu0 %611
      %v614 = vmul.f32 %v608, %v612
      %v615 = vmul.f32 %v602, %v612
      %617 = vrot.lane.b32.xlu0 %v614, 32
      %v618 = vpop.permute.xlu0 %617
      %620 = vst.msk [vmem:[#allocation2] sm:$0xff] %vm381, %v618
      %v621 = vsel %vm381, %v618, 0
      %623 = vmatprep.subr.mxu0 0.0
      %624 = vmatpush1.msra.mxu0 0.0
      %625 = vmatprep.subr.mxu0 0.0
      %626 = vmatpush1.msra.mxu0 0.0
      %627 = vmatprep.subr.mxu0 0.0
      %628 = vmatpush1.msra.mxu0 0.0
      %629 = vmatprep.subr.mxu0 0.0
      %630 = vmatpush1.msra.mxu0 0.0
      %631 = vmatprep.subr.mxu0 0.0
      %632 = vmatpush1.msra.mxu0 0.0
      %633 = vmatprep.subr.mxu0 0.0
      %634 = vmatpush1.msra.mxu0 0.0
      %635 = vmatprep.subr.mxu0 0.0
      %636 = vmatpush1.msra.mxu0 0.0
      %637 = vmatprep.subr.mxu0 0.0
      %638 = vmatpush1.msra.mxu0 0.0
      %639 = vmatprep.subr.mxu0 0.0
      %640 = vmatpush1.msra.mxu0 0.0
      %641 = vmatprep.subr.mxu0 0.0
      %642 = vmatpush1.msra.mxu0 0.0
      %643 = vmatprep.subr.mxu0 0.0
      %644 = vmatpush1.msra.mxu0 0.0
      %645 = vmatprep.subr.mxu0 0.0
      %646 = vmatpush1.msra.mxu0 0.0
      %647 = vmatprep.subr.mxu0 0.0
      %648 = vmatpush1.msra.mxu0 %v353
      %649 = vmatprep.subr.mxu0 0.0
      %650 = vmatpush1.msra.mxu0 %v352
      %651 = vmatprep.subr.mxu0 0.0
      %652 = vmatpush1.msra.mxu0 %v351
      %653 = vmatprep.subr.mxu0 0.0
      %654 = vmatpush1.msra.mxu0 %v350
      %655 = vmatprep.subr.mxu0 0.0
      %656 = vmatpush2.msra.mxu0 0.0
      %657 = vmatprep.subr.mxu0 0.0
      %658 = vmatpush2.msra.mxu0 0.0
      %659 = vmatprep.subr.mxu0 0.0
      %660 = vmatpush2.msra.mxu0 0.0
      %661 = vmatprep.subr.mxu0 0.0
      %662 = vmatpush2.msra.mxu0 0.0
      %663 = vmatprep.subr.mxu0 0.0
      %664 = vmatpush2.msra.mxu0 0.0
      %665 = vmatprep.subr.mxu0 0.0
      %666 = vmatpush2.msra.mxu0 0.0
      %667 = vmatprep.subr.mxu0 0.0
      %668 = vmatpush2.msra.mxu0 0.0
      %669 = vmatprep.subr.mxu0 0.0
      %670 = vmatpush2.msra.mxu0 0.0
      %671 = vmatprep.subr.mxu0 0.0
      %672 = vmatpush2.msra.mxu0 0.0
      %673 = vmatprep.subr.mxu0 0.0
      %674 = vmatpush2.msra.mxu0 0.0
      %675 = vmatprep.subr.mxu0 0.0
      %676 = vmatpush2.msra.mxu0 0.0
      %677 = vmatprep.subr.mxu0 0.0
      %678 = vmatpush2.msra.mxu0 0.0
      %679 = vmatprep.subr.mxu0 0.0
      %680 = vmatpush2.msra.mxu0 0.0
      %681 = vmatprep.subr.mxu0 0.0
      %682 = vmatpush2.msra.mxu0 0.0
      %683 = vmatprep.subr.mxu0 0.0
      %684 = vmatpush2.msra.mxu0 0.0
      %685 = vmatprep.subr.mxu0 0.0
      %686 = vmatpush2.msra.mxu0 0.0
      %687 = vmatprep.mubr.f32.mxu0 0.0
      %688 = vmatmul.mubr.f32.gmra.mxu0 %v621
      %v689 = vpop.f32.mrf.mxu0
      %v690 = vadd.f32 0.0, %v689
      %v691 = vpop.f32.mrf.mxu0
      %692 = vdwg.mxu0
      %v693 = vadd.f32 %v478, %v690
      %v694 = vxor.u32 %v693, 2147483648
      %v695 = vmul.f32 %v694, 1.442695
      %v696 = vpow.pop %v695
      %v697 = vadd.f32 %v696, 1.0
      %v698 = vrcp.pop %v697
      %v699 = vmul.f32 1.0, %v698
      %v700 = vtanh.pop %v693
      %v701 = vmul.f32 %v699, %v615
      %703 = vrot.lane.b32.xlu0 %v700, 64
      %v704 = vpop.permute.xlu0 %703
      %v706 = vmul.f32 %v699, %v704
      %708 = vrot.lane.b32.xlu0 %v706, 32
      %v709 = vpop.permute.xlu0 %708
      %v711 = vadd.f32 %v701, %v709
      %v712 = vtanh.pop %v711
      %714 = vrot.lane.b32.xlu0 %v712, 64
      %v715 = vpop.permute.xlu0 %714
      %v717 = vmul.f32 %v699, %v715
      %719 = vset.pattern.permute.xlu0 0
      %720 = vperm.xlu0 %719, %v368
      %v721 = vpop.permute.xlu0 %720
      %v723 = vmul.f32 %v717, %v721
      %v724 = vmul.f32 %v711, %v721
      %726 = vrot.lane.b32.xlu0 %v723, 32
      %v727 = vpop.permute.xlu0 %726
      %729 = vst.msk [vmem:[#allocation2 + $0x8] sm:$0xff] %vm381, %v727
      %v730 = vsel %vm381, %v727, 0
      %732 = vmatprep.subr.mxu0 0.0
      %733 = vmatpush1.msra.mxu0 0.0
      %734 = vmatprep.subr.mxu0 0.0
      %735 = vmatpush1.msra.mxu0 0.0
      %736 = vmatprep.subr.mxu0 0.0
      %737 = vmatpush1.msra.mxu0 0.0
      %738 = vmatprep.subr.mxu0 0.0
      %739 = vmatpush1.msra.mxu0 0.0
      %740 = vmatprep.subr.mxu0 0.0
      %741 = vmatpush1.msra.mxu0 0.0
      %742 = vmatprep.subr.mxu0 0.0
      %743 = vmatpush1.msra.mxu0 0.0
      %744 = vmatprep.subr.mxu0 0.0
      %745 = vmatpush1.msra.mxu0 0.0
      %746 = vmatprep.subr.mxu0 0.0
      %747 = vmatpush1.msra.mxu0 0.0
      %748 = vmatprep.subr.mxu0 0.0
      %749 = vmatpush1.msra.mxu0 0.0
      %750 = vmatprep.subr.mxu0 0.0
      %751 = vmatpush1.msra.mxu0 0.0
      %752 = vmatprep.subr.mxu0 0.0
      %753 = vmatpush1.msra.mxu0 0.0
      %754 = vmatprep.subr.mxu0 0.0
      %755 = vmatpush1.msra.mxu0 0.0
      %756 = vmatprep.subr.mxu0 0.0
      %757 = vmatpush1.msra.mxu0 %v353
      %758 = vmatprep.subr.mxu0 0.0
      %759 = vmatpush1.msra.mxu0 %v352
      %760 = vmatprep.subr.mxu0 0.0
      %761 = vmatpush1.msra.mxu0 %v351
      %762 = vmatprep.subr.mxu0 0.0
      %763 = vmatpush1.msra.mxu0 %v350
      %764 = vmatprep.subr.mxu0 0.0
      %765 = vmatpush2.msra.mxu0 0.0
      %766 = vmatprep.subr.mxu0 0.0
      %767 = vmatpush2.msra.mxu0 0.0
      %768 = vmatprep.subr.mxu0 0.0
      %769 = vmatpush2.msra.mxu0 0.0
      %770 = vmatprep.subr.mxu0 0.0
      %771 = vmatpush2.msra.mxu0 0.0
      %772 = vmatprep.subr.mxu0 0.0
      %773 = vmatpush2.msra.mxu0 0.0
      %774 = vmatprep.subr.mxu0 0.0
      %775 = vmatpush2.msra.mxu0 0.0
      %776 = vmatprep.subr.mxu0 0.0
      %777 = vmatpush2.msra.mxu0 0.0
      %778 = vmatprep.subr.mxu0 0.0
      %779 = vmatpush2.msra.mxu0 0.0
      %780 = vmatprep.subr.mxu0 0.0
      %781 = vmatpush2.msra.mxu0 0.0
      %782 = vmatprep.subr.mxu0 0.0
      %783 = vmatpush2.msra.mxu0 0.0
      %784 = vmatprep.subr.mxu0 0.0
      %785 = vmatpush2.msra.mxu0 0.0
      %786 = vmatprep.subr.mxu0 0.0
      %787 = vmatpush2.msra.mxu0 0.0
      %788 = vmatprep.subr.mxu0 0.0
      %789 = vmatpush2.msra.mxu0 0.0
      %790 = vmatprep.subr.mxu0 0.0
      %791 = vmatpush2.msra.mxu0 0.0
      %792 = vmatprep.subr.mxu0 0.0
      %793 = vmatpush2.msra.mxu0 0.0
      %794 = vmatprep.subr.mxu0 0.0
      %795 = vmatpush2.msra.mxu0 0.0
      %796 = vmatprep.mubr.f32.mxu0 0.0
      %797 = vmatmul.mubr.f32.gmra.mxu0 %v730
      %v798 = vpop.f32.mrf.mxu0
      %v799 = vadd.f32 0.0, %v798
      %v800 = vpop.f32.mrf.mxu0
      %801 = vdwg.mxu0
      %v802 = vadd.f32 %v483, %v799
      %v803 = vxor.u32 %v802, 2147483648
      %v804 = vmul.f32 %v803, 1.442695
      %v805 = vpow.pop %v804
      %v806 = vadd.f32 %v805, 1.0
      %v807 = vrcp.pop %v806
      %v808 = vmul.f32 1.0, %v807
      %v809 = vtanh.pop %v802
      %v810 = vmul.f32 %v808, %v724
      %812 = vrot.lane.b32.xlu0 %v809, 64
      %v813 = vpop.permute.xlu0 %812
      %v815 = vmul.f32 %v808, %v813
      %817 = vrot.lane.b32.xlu0 %v815, 32
      %v818 = vpop.permute.xlu0 %817
      %v820 = vadd.f32 %v810, %v818
      %v821 = vtanh.pop %v820
      %823 = vrot.lane.b32.xlu0 %v821, 64
      %v824 = vpop.permute.xlu0 %823
      %v826 = vmul.f32 %v808, %v824
      %828 = vset.pattern.permute.xlu0 0
      %829 = vperm.xlu0 %828, %v369
      %v830 = vpop.permute.xlu0 %829
      %v832 = vmul.f32 %v826, %v830
      %v833 = vmul.f32 %v820, %v830
      %835 = vrot.lane.b32.xlu0 %v832, 32
      %v836 = vpop.permute.xlu0 %835
      %838 = vst.msk [vmem:[#allocation2 + $0x10] sm:$0xff] %vm381, %v836
      %v839 = vsel %vm381, %v836, 0
      %841 = vmatprep.subr.mxu0 0.0
      %842 = vmatpush1.msra.mxu0 0.0
      %843 = vmatprep.subr.mxu0 0.0
      %844 = vmatpush1.msra.mxu0 0.0
      %845 = vmatprep.subr.mxu0 0.0
      %846 = vmatpush1.msra.mxu0 0.0
      %847 = vmatprep.subr.mxu0 0.0
      %848 = vmatpush1.msra.mxu0 0.0
      %849 = vmatprep.subr.mxu0 0.0
      %850 = vmatpush1.msra.mxu0 0.0
      %851 = vmatprep.subr.mxu0 0.0
      %852 = vmatpush1.msra.mxu0 0.0
      %853 = vmatprep.subr.mxu0 0.0
      %854 = vmatpush1.msra.mxu0 0.0
      %855 = vmatprep.subr.mxu0 0.0
      %856 = vmatpush1.msra.mxu0 0.0
      %857 = vmatprep.subr.mxu0 0.0
      %858 = vmatpush1.msra.mxu0 0.0
      %859 = vmatprep.subr.mxu0 0.0
      %860 = vmatpush1.msra.mxu0 0.0
      %861 = vmatprep.subr.mxu0 0.0
      %862 = vmatpush1.msra.mxu0 0.0
      %863 = vmatprep.subr.mxu0 0.0
      %864 = vmatpush1.msra.mxu0 0.0
      %865 = vmatprep.subr.mxu0 0.0
      %866 = vmatpush1.msra.mxu0 %v353
      %867 = vmatprep.subr.mxu0 0.0
      %868 = vmatpush1.msra.mxu0 %v352
      %869 = vmatprep.subr.mxu0 0.0
      %870 = vmatpush1.msra.mxu0 %v351
      %871 = vmatprep.subr.mxu0 0.0
      %872 = vmatpush1.msra.mxu0 %v350
      %873 = vmatprep.subr.mxu0 0.0
      %874 = vmatpush2.msra.mxu0 0.0
      %875 = vmatprep.subr.mxu0 0.0
      %876 = vmatpush2.msra.mxu0 0.0
      %877 = vmatprep.subr.mxu0 0.0
      %878 = vmatpush2.msra.mxu0 0.0
      %879 = vmatprep.subr.mxu0 0.0
      %880 = vmatpush2.msra.mxu0 0.0
      %881 = vmatprep.subr.mxu0 0.0
      %882 = vmatpush2.msra.mxu0 0.0
      %883 = vmatprep.subr.mxu0 0.0
      %884 = vmatpush2.msra.mxu0 0.0
      %885 = vmatprep.subr.mxu0 0.0
      %886 = vmatpush2.msra.mxu0 0.0
      %887 = vmatprep.subr.mxu0 0.0
      %888 = vmatpush2.msra.mxu0 0.0
      %889 = vmatprep.subr.mxu0 0.0
      %890 = vmatpush2.msra.mxu0 0.0
      %891 = vmatprep.subr.mxu0 0.0
      %892 = vmatpush2.msra.mxu0 0.0
      %893 = vmatprep.subr.mxu0 0.0
      %894 = vmatpush2.msra.mxu0 0.0
      %895 = vmatprep.subr.mxu0 0.0
      %896 = vmatpush2.msra.mxu0 0.0
      %897 = vmatprep.subr.mxu0 0.0
      %898 = vmatpush2.msra.mxu0 0.0
      %899 = vmatprep.subr.mxu0 0.0
      %900 = vmatpush2.msra.mxu0 0.0
      %901 = vmatprep.subr.mxu0 0.0
      %902 = vmatpush2.msra.mxu0 0.0
      %903 = vmatprep.subr.mxu0 0.0
      %904 = vmatpush2.msra.mxu0 0.0
      %905 = vmatprep.mubr.f32.mxu0 0.0
      %906 = vmatmul.mubr.f32.gmra.mxu0 %v839
      %v907 = vpop.f32.mrf.mxu0
      %v908 = vadd.f32 0.0, %v907
      %v909 = vpop.f32.mrf.mxu0
      %910 = vdwg.mxu0
      %v911 = vadd.f32 %v488, %v908
      %v912 = vxor.u32 %v911, 2147483648
      %v913 = vmul.f32 %v912, 1.442695
      %v914 = vpow.pop %v913
      %v915 = vadd.f32 %v914, 1.0
      %v916 = vrcp.pop %v915
      %v917 = vmul.f32 1.0, %v916
      %v918 = vtanh.pop %v911
      %v919 = vmul.f32 %v917, %v833
      %921 = vrot.lane.b32.xlu0 %v918, 64
      %v922 = vpop.permute.xlu0 %921
      %v924 = vmul.f32 %v917, %v922
      %926 = vrot.lane.b32.xlu0 %v924, 32
      %v927 = vpop.permute.xlu0 %926
      %v929 = vadd.f32 %v919, %v927
      %v930 = vtanh.pop %v929
      %932 = vrot.lane.b32.xlu0 %v930, 64
      %v933 = vpop.permute.xlu0 %932
      %v935 = vmul.f32 %v917, %v933
      %937 = vset.pattern.permute.xlu0 0
      %938 = vperm.xlu0 %937, %v370
      %v939 = vpop.permute.xlu0 %938
      %v941 = vmul.f32 %v935, %v939
      %v942 = vmul.f32 %v929, %v939
      %944 = vrot.lane.b32.xlu0 %v941, 32
      %v945 = vpop.permute.xlu0 %944
      %947 = vst.msk [vmem:[#allocation2 + $0x18] sm:$0xff] %vm381, %v945
      %v948 = vsel %vm381, %v945, 0
      %950 = vmatprep.subr.mxu0 0.0
      %951 = vmatpush1.msra.mxu0 0.0
      %952 = vmatprep.subr.mxu0 0.0
      %953 = vmatpush1.msra.mxu0 0.0
      %954 = vmatprep.subr.mxu0 0.0
      %955 = vmatpush1.msra.mxu0 0.0
      %956 = vmatprep.subr.mxu0 0.0
      %957 = vmatpush1.msra.mxu0 0.0
      %958 = vmatprep.subr.mxu0 0.0
      %959 = vmatpush1.msra.mxu0 0.0
      %960 = vmatprep.subr.mxu0 0.0
      %961 = vmatpush1.msra.mxu0 0.0
      %962 = vmatprep.subr.mxu0 0.0
      %963 = vmatpush1.msra.mxu0 0.0
      %964 = vmatprep.subr.mxu0 0.0
      %965 = vmatpush1.msra.mxu0 0.0
      %966 = vmatprep.subr.mxu0 0.0
      %967 = vmatpush1.msra.mxu0 0.0
      %968 = vmatprep.subr.mxu0 0.0
      %969 = vmatpush1.msra.mxu0 0.0
      %970 = vmatprep.subr.mxu0 0.0
      %971 = vmatpush1.msra.mxu0 0.0
      %972 = vmatprep.subr.mxu0 0.0
      %973 = vmatpush1.msra.mxu0 0.0
      %974 = vmatprep.subr.mxu0 0.0
      %975 = vmatpush1.msra.mxu0 %v353
      %976 = vmatprep.subr.mxu0 0.0
      %977 = vmatpush1.msra.mxu0 %v352
      %978 = vmatprep.subr.mxu0 0.0
      %979 = vmatpush1.msra.mxu0 %v351
      %980 = vmatprep.subr.mxu0 0.0
      %981 = vmatpush1.msra.mxu0 %v350
      %982 = vmatprep.subr.mxu0 0.0
      %983 = vmatpush2.msra.mxu0 0.0
      %984 = vmatprep.subr.mxu0 0.0
      %985 = vmatpush2.msra.mxu0 0.0
      %986 = vmatprep.subr.mxu0 0.0
      %987 = vmatpush2.msra.mxu0 0.0
      %988 = vmatprep.subr.mxu0 0.0
      %989 = vmatpush2.msra.mxu0 0.0
      %990 = vmatprep.subr.mxu0 0.0
      %991 = vmatpush2.msra.mxu0 0.0
      %992 = vmatprep.subr.mxu0 0.0
      %993 = vmatpush2.msra.mxu0 0.0
      %994 = vmatprep.subr.mxu0 0.0
      %995 = vmatpush2.msra.mxu0 0.0
      %996 = vmatprep.subr.mxu0 0.0
      %997 = vmatpush2.msra.mxu0 0.0
      %998 = vmatprep.subr.mxu0 0.0
      %999 = vmatpush2.msra.mxu0 0.0
      %1000 = vmatprep.subr.mxu0 0.0
      %1001 = vmatpush2.msra.mxu0 0.0
      %1002 = vmatprep.subr.mxu0 0.0
      %1003 = vmatpush2.msra.mxu0 0.0
      %1004 = vmatprep.subr.mxu0 0.0
      %1005 = vmatpush2.msra.mxu0 0.0
      %1006 = vmatprep.subr.mxu0 0.0
      %1007 = vmatpush2.msra.mxu0 0.0
      %1008 = vmatprep.subr.mxu0 0.0
      %1009 = vmatpush2.msra.mxu0 0.0
      %1010 = vmatprep.subr.mxu0 0.0
      %1011 = vmatpush2.msra.mxu0 0.0
      %1012 = vmatprep.subr.mxu0 0.0
      %1013 = vmatpush2.msra.mxu0 0.0
      %1014 = vmatprep.mubr.f32.mxu0 0.0
      %1015 = vmatmul.mubr.f32.gmra.mxu0 %v948
      %v1016 = vpop.f32.mrf.mxu0
      %v1017 = vadd.f32 0.0, %v1016
      %v1018 = vpop.f32.mrf.mxu0
      %1019 = vdwg.mxu0
      %v1020 = vadd.f32 %v493, %v1017
      %v1021 = vxor.u32 %v1020, 2147483648
      %v1022 = vmul.f32 %v1021, 1.442695
      %v1023 = vpow.pop %v1022
      %v1024 = vadd.f32 %v1023, 1.0
      %v1025 = vrcp.pop %v1024
      %v1026 = vmul.f32 1.0, %v1025
      %v1027 = vtanh.pop %v1020
      %v1028 = vmul.f32 %v1026, %v942
      %1030 = vrot.lane.b32.xlu0 %v1027, 64
      %v1031 = vpop.permute.xlu0 %1030
      %v1033 = vmul.f32 %v1026, %v1031
      %1035 = vrot.lane.b32.xlu0 %v1033, 32
      %v1036 = vpop.permute.xlu0 %1035
      %v1038 = vadd.f32 %v1028, %v1036
      %v1039 = vtanh.pop %v1038
      %1041 = vrot.lane.b32.xlu0 %v1039, 64
      %v1042 = vpop.permute.xlu0 %1041
      %v1044 = vmul.f32 %v1026, %v1042
      %1046 = vset.pattern.permute.xlu0 0
      %1047 = vperm.xlu0 %1046, %v371
      %v1048 = vpop.permute.xlu0 %1047
      %v1050 = vmul.f32 %v1044, %v1048
      %v1051 = vmul.f32 %v1038, %v1048
      %1053 = vrot.lane.b32.xlu0 %v1050, 32
      %v1054 = vpop.permute.xlu0 %1053
      %1056 = vst.msk [vmem:[#allocation2 + $0x20] sm:$0xff] %vm381, %v1054
      %v1057 = vsel %vm381, %v1054, 0
      %1059 = vmatprep.subr.mxu0 0.0
      %1060 = vmatpush1.msra.mxu0 0.0
      %1061 = vmatprep.subr.mxu0 0.0
      %1062 = vmatpush1.msra.mxu0 0.0
      %1063 = vmatprep.subr.mxu0 0.0
      %1064 = vmatpush1.msra.mxu0 0.0
      %1065 = vmatprep.subr.mxu0 0.0
      %1066 = vmatpush1.msra.mxu0 0.0
      %1067 = vmatprep.subr.mxu0 0.0
      %1068 = vmatpush1.msra.mxu0 0.0
      %1069 = vmatprep.subr.mxu0 0.0
      %1070 = vmatpush1.msra.mxu0 0.0
      %1071 = vmatprep.subr.mxu0 0.0
      %1072 = vmatpush1.msra.mxu0 0.0
      %1073 = vmatprep.subr.mxu0 0.0
      %1074 = vmatpush1.msra.mxu0 0.0
      %1075 = vmatprep.subr.mxu0 0.0
      %1076 = vmatpush1.msra.mxu0 0.0
      %1077 = vmatprep.subr.mxu0 0.0
      %1078 = vmatpush1.msra.mxu0 0.0
      %1079 = vmatprep.subr.mxu0 0.0
      %1080 = vmatpush1.msra.mxu0 0.0
      %1081 = vmatprep.subr.mxu0 0.0
      %1082 = vmatpush1.msra.mxu0 0.0
      %1083 = vmatprep.subr.mxu0 0.0
      %1084 = vmatpush1.msra.mxu0 %v353
      %1085 = vmatprep.subr.mxu0 0.0
      %1086 = vmatpush1.msra.mxu0 %v352
      %1087 = vmatprep.subr.mxu0 0.0
      %1088 = vmatpush1.msra.mxu0 %v351
      %1089 = vmatprep.subr.mxu0 0.0
      %1090 = vmatpush1.msra.mxu0 %v350
      %1091 = vmatprep.subr.mxu0 0.0
      %1092 = vmatpush2.msra.mxu0 0.0
      %1093 = vmatprep.subr.mxu0 0.0
      %1094 = vmatpush2.msra.mxu0 0.0
      %1095 = vmatprep.subr.mxu0 0.0
      %1096 = vmatpush2.msra.mxu0 0.0
      %1097 = vmatprep.subr.mxu0 0.0
      %1098 = vmatpush2.msra.mxu0 0.0
      %1099 = vmatprep.subr.mxu0 0.0
      %1100 = vmatpush2.msra.mxu0 0.0
      %1101 = vmatprep.subr.mxu0 0.0
      %1102 = vmatpush2.msra.mxu0 0.0
      %1103 = vmatprep.subr.mxu0 0.0
      %1104 = vmatpush2.msra.mxu0 0.0
      %1105 = vmatprep.subr.mxu0 0.0
      %1106 = vmatpush2.msra.mxu0 0.0
      %1107 = vmatprep.subr.mxu0 0.0
      %1108 = vmatpush2.msra.mxu0 0.0
      %1109 = vmatprep.subr.mxu0 0.0
      %1110 = vmatpush2.msra.mxu0 0.0
      %1111 = vmatprep.subr.mxu0 0.0
      %1112 = vmatpush2.msra.mxu0 0.0
      %1113 = vmatprep.subr.mxu0 0.0
      %1114 = vmatpush2.msra.mxu0 0.0
      %1115 = vmatprep.subr.mxu0 0.0
      %1116 = vmatpush2.msra.mxu0 0.0
      %1117 = vmatprep.subr.mxu0 0.0
      %1118 = vmatpush2.msra.mxu0 0.0
      %1119 = vmatprep.subr.mxu0 0.0
      %1120 = vmatpush2.msra.mxu0 0.0
      %1121 = vmatprep.subr.mxu0 0.0
      %1122 = vmatpush2.msra.mxu0 0.0
      %1123 = vmatprep.mubr.f32.mxu0 0.0
      %1124 = vmatmul.mubr.f32.gmra.mxu0 %v1057
      %v1125 = vpop.f32.mrf.mxu0
      %v1126 = vadd.f32 0.0, %v1125
      %v1127 = vpop.f32.mrf.mxu0
      %1128 = vdwg.mxu0
      %v1129 = vadd.f32 %v498, %v1126
      %v1130 = vxor.u32 %v1129, 2147483648
      %v1131 = vmul.f32 %v1130, 1.442695
      %v1132 = vpow.pop %v1131
      %v1133 = vadd.f32 %v1132, 1.0
      %v1134 = vrcp.pop %v1133
      %v1135 = vmul.f32 1.0, %v1134
      %v1136 = vtanh.pop %v1129
      %v1137 = vmul.f32 %v1135, %v1051
      %1139 = vrot.lane.b32.xlu0 %v1136, 64
      %v1140 = vpop.permute.xlu0 %1139
      %v1142 = vmul.f32 %v1135, %v1140
      %1144 = vrot.lane.b32.xlu0 %v1142, 32
      %v1145 = vpop.permute.xlu0 %1144
      %v1147 = vadd.f32 %v1137, %v1145
      %v1148 = vtanh.pop %v1147
      %1150 = vrot.lane.b32.xlu0 %v1148, 64
      %v1151 = vpop.permute.xlu0 %1150
      %v1153 = vmul.f32 %v1135, %v1151
      %1155 = vset.pattern.permute.xlu0 0
      %1156 = vperm.xlu0 %1155, %v372
      %v1157 = vpop.permute.xlu0 %1156
      %v1159 = vmul.f32 %v1153, %v1157
      %v1160 = vmul.f32 %v1147, %v1157
      %1162 = vrot.lane.b32.xlu0 %v1159, 32
      %v1163 = vpop.permute.xlu0 %1162
      %1165 = vst.msk [vmem:[#allocation2 + $0x28] sm:$0xff] %vm381, %v1163
      %v1166 = vsel %vm381, %v1163, 0
      %1168 = vmatprep.subr.mxu0 0.0
      %1169 = vmatpush1.msra.mxu0 0.0
      %1170 = vmatprep.subr.mxu0 0.0
      %1171 = vmatpush1.msra.mxu0 0.0
      %1172 = vmatprep.subr.mxu0 0.0
      %1173 = vmatpush1.msra.mxu0 0.0
      %1174 = vmatprep.subr.mxu0 0.0
      %1175 = vmatpush1.msra.mxu0 0.0
      %1176 = vmatprep.subr.mxu0 0.0
      %1177 = vmatpush1.msra.mxu0 0.0
      %1178 = vmatprep.subr.mxu0 0.0
      %1179 = vmatpush1.msra.mxu0 0.0
      %1180 = vmatprep.subr.mxu0 0.0
      %1181 = vmatpush1.msra.mxu0 0.0
      %1182 = vmatprep.subr.mxu0 0.0
      %1183 = vmatpush1.msra.mxu0 0.0
      %1184 = vmatprep.subr.mxu0 0.0
      %1185 = vmatpush1.msra.mxu0 0.0
      %1186 = vmatprep.subr.mxu0 0.0
      %1187 = vmatpush1.msra.mxu0 0.0
      %1188 = vmatprep.subr.mxu0 0.0
      %1189 = vmatpush1.msra.mxu0 0.0
      %1190 = vmatprep.subr.mxu0 0.0
      %1191 = vmatpush1.msra.mxu0 0.0
      %1192 = vmatprep.subr.mxu0 0.0
      %1193 = vmatpush1.msra.mxu0 %v353
      %1194 = vmatprep.subr.mxu0 0.0
      %1195 = vmatpush1.msra.mxu0 %v352
      %1196 = vmatprep.subr.mxu0 0.0
      %1197 = vmatpush1.msra.mxu0 %v351
      %1198 = vmatprep.subr.mxu0 0.0
      %1199 = vmatpush1.msra.mxu0 %v350
      %1200 = vmatprep.subr.mxu0 0.0
      %1201 = vmatpush2.msra.mxu0 0.0
      %1202 = vmatprep.subr.mxu0 0.0
      %1203 = vmatpush2.msra.mxu0 0.0
      %1204 = vmatprep.subr.mxu0 0.0
      %1205 = vmatpush2.msra.mxu0 0.0
      %1206 = vmatprep.subr.mxu0 0.0
      %1207 = vmatpush2.msra.mxu0 0.0
      %1208 = vmatprep.subr.mxu0 0.0
      %1209 = vmatpush2.msra.mxu0 0.0
      %1210 = vmatprep.subr.mxu0 0.0
      %1211 = vmatpush2.msra.mxu0 0.0
      %1212 = vmatprep.subr.mxu0 0.0
      %1213 = vmatpush2.msra.mxu0 0.0
      %1214 = vmatprep.subr.mxu0 0.0
      %1215 = vmatpush2.msra.mxu0 0.0
      %1216 = vmatprep.subr.mxu0 0.0
      %1217 = vmatpush2.msra.mxu0 0.0
      %1218 = vmatprep.subr.mxu0 0.0
      %1219 = vmatpush2.msra.mxu0 0.0
      %1220 = vmatprep.subr.mxu0 0.0
      %1221 = vmatpush2.msra.mxu0 0.0
      %1222 = vmatprep.subr.mxu0 0.0
      %1223 = vmatpush2.msra.mxu0 0.0
      %1224 = vmatprep.subr.mxu0 0.0
      %1225 = vmatpush2.msra.mxu0 0.0
      %1226 = vmatprep.subr.mxu0 0.0
      %1227 = vmatpush2.msra.mxu0 0.0
      %1228 = vmatprep.subr.mxu0 0.0
      %1229 = vmatpush2.msra.mxu0 0.0
      %1230 = vmatprep.subr.mxu0 0.0
      %1231 = vmatpush2.msra.mxu0 0.0
      %1232 = vmatprep.mubr.f32.mxu0 0.0
      %1233 = vmatmul.mubr.f32.gmra.mxu0 %v1166
      %v1234 = vpop.f32.mrf.mxu0
      %v1235 = vadd.f32 0.0, %v1234
      %v1236 = vpop.f32.mrf.mxu0
      %1237 = vdwg.mxu0
      %v1238 = vadd.f32 %v503, %v1235
      %v1239 = vxor.u32 %v1238, 2147483648
      %v1240 = vmul.f32 %v1239, 1.442695
      %v1241 = vpow.pop %v1240
      %v1242 = vadd.f32 %v1241, 1.0
      %v1243 = vrcp.pop %v1242
      %v1244 = vmul.f32 1.0, %v1243
      %v1245 = vtanh.pop %v1238
      %v1246 = vmul.f32 %v1244, %v1160
      %1248 = vrot.lane.b32.xlu0 %v1245, 64
      %v1249 = vpop.permute.xlu0 %1248
      %v1251 = vmul.f32 %v1244, %v1249
      %1253 = vrot.lane.b32.xlu0 %v1251, 32
      %v1254 = vpop.permute.xlu0 %1253
      %v1256 = vadd.f32 %v1246, %v1254
      %v1257 = vtanh.pop %v1256
      %1259 = vrot.lane.b32.xlu0 %v1257, 64
      %v1260 = vpop.permute.xlu0 %1259
      %v1262 = vmul.f32 %v1244, %v1260
      %1264 = vset.pattern.permute.xlu0 0
      %1265 = vperm.xlu0 %1264, %v373
      %v1266 = vpop.permute.xlu0 %1265
      %v1268 = vmul.f32 %v1262, %v1266
      %v1269 = vmul.f32 %v1256, %v1266
      %1271 = vrot.lane.b32.xlu0 %v1268, 32
      %v1272 = vpop.permute.xlu0 %1271
      %1274 = vst.msk [vmem:[#allocation2 + $0x30] sm:$0xff] %vm381, %v1272
      %v1275 = vsel %vm381, %v1272, 0
      %1277 = vmatprep.subr.mxu0 0.0
      %1278 = vmatpush1.msra.mxu0 0.0
      %1279 = vmatprep.subr.mxu0 0.0
      %1280 = vmatpush1.msra.mxu0 0.0
      %1281 = vmatprep.subr.mxu0 0.0
      %1282 = vmatpush1.msra.mxu0 0.0
      %1283 = vmatprep.subr.mxu0 0.0
      %1284 = vmatpush1.msra.mxu0 0.0
      %1285 = vmatprep.subr.mxu0 0.0
      %1286 = vmatpush1.msra.mxu0 0.0
      %1287 = vmatprep.subr.mxu0 0.0
      %1288 = vmatpush1.msra.mxu0 0.0
      %1289 = vmatprep.subr.mxu0 0.0
      %1290 = vmatpush1.msra.mxu0 0.0
      %1291 = vmatprep.subr.mxu0 0.0
      %1292 = vmatpush1.msra.mxu0 0.0
      %1293 = vmatprep.subr.mxu0 0.0
      %1294 = vmatpush1.msra.mxu0 0.0
      %1295 = vmatprep.subr.mxu0 0.0
      %1296 = vmatpush1.msra.mxu0 0.0
      %1297 = vmatprep.subr.mxu0 0.0
      %1298 = vmatpush1.msra.mxu0 0.0
      %1299 = vmatprep.subr.mxu0 0.0
      %1300 = vmatpush1.msra.mxu0 0.0
      %1301 = vmatprep.subr.mxu0 0.0
      %1302 = vmatpush1.msra.mxu0 %v353
      %1303 = vmatprep.subr.mxu0 0.0
      %1304 = vmatpush1.msra.mxu0 %v352
      %1305 = vmatprep.subr.mxu0 0.0
      %1306 = vmatpush1.msra.mxu0 %v351
      %1307 = vmatprep.subr.mxu0 0.0
      %1308 = vmatpush1.msra.mxu0 %v350
      %1309 = vmatprep.subr.mxu0 0.0
      %1310 = vmatpush2.msra.mxu0 0.0
      %1311 = vmatprep.subr.mxu0 0.0
      %1312 = vmatpush2.msra.mxu0 0.0
      %1313 = vmatprep.subr.mxu0 0.0
      %1314 = vmatpush2.msra.mxu0 0.0
      %1315 = vmatprep.subr.mxu0 0.0
      %1316 = vmatpush2.msra.mxu0 0.0
      %1317 = vmatprep.subr.mxu0 0.0
      %1318 = vmatpush2.msra.mxu0 0.0
      %1319 = vmatprep.subr.mxu0 0.0
      %1320 = vmatpush2.msra.mxu0 0.0
      %1321 = vmatprep.subr.mxu0 0.0
      %1322 = vmatpush2.msra.mxu0 0.0
      %1323 = vmatprep.subr.mxu0 0.0
      %1324 = vmatpush2.msra.mxu0 0.0
      %1325 = vmatprep.subr.mxu0 0.0
      %1326 = vmatpush2.msra.mxu0 0.0
      %1327 = vmatprep.subr.mxu0 0.0
      %1328 = vmatpush2.msra.mxu0 0.0
      %1329 = vmatprep.subr.mxu0 0.0
      %1330 = vmatpush2.msra.mxu0 0.0
      %1331 = vmatprep.subr.mxu0 0.0
      %1332 = vmatpush2.msra.mxu0 0.0
      %1333 = vmatprep.subr.mxu0 0.0
      %1334 = vmatpush2.msra.mxu0 0.0
      %1335 = vmatprep.subr.mxu0 0.0
      %1336 = vmatpush2.msra.mxu0 0.0
      %1337 = vmatprep.subr.mxu0 0.0
      %1338 = vmatpush2.msra.mxu0 0.0
      %1339 = vmatprep.subr.mxu0 0.0
      %1340 = vmatpush2.msra.mxu0 0.0
      %1341 = vmatprep.mubr.f32.mxu0 0.0
      %1342 = vmatmul.mubr.f32.gmra.mxu0 %v1275
      %v1343 = vpop.f32.mrf.mxu0
      %v1344 = vadd.f32 0.0, %v1343
      %v1345 = vpop.f32.mrf.mxu0
      %1346 = vdwg.mxu0
      %v1347 = vadd.f32 %v508, %v1344
      %v1348 = vxor.u32 %v1347, 2147483648
      %v1349 = vmul.f32 %v1348, 1.442695
      %v1350 = vpow.pop %v1349
      %v1351 = vadd.f32 %v1350, 1.0
      %v1352 = vrcp.pop %v1351
      %v1353 = vmul.f32 1.0, %v1352
      %v1354 = vtanh.pop %v1347
      %v1355 = vmul.f32 %v1353, %v1269
      %1357 = vrot.lane.b32.xlu0 %v1354, 64
      %v1358 = vpop.permute.xlu0 %1357
      %v1360 = vmul.f32 %v1353, %v1358
      %1362 = vrot.lane.b32.xlu0 %v1360, 32
      %v1363 = vpop.permute.xlu0 %1362
      %v1365 = vadd.f32 %v1355, %v1363
      %v1366 = vtanh.pop %v1365
      %1368 = vrot.lane.b32.xlu0 %v1366, 64
      %v1369 = vpop.permute.xlu0 %1368
      %v1371 = vmul.f32 %v1353, %v1369
      %1373 = vset.pattern.permute.xlu0 0
      %1374 = vperm.xlu0 %1373, %v374
      %v1375 = vpop.permute.xlu0 %1374
      %v1377 = vmul.f32 %v1371, %v1375
      %1379 = vrot.lane.b32.xlu0 %v1377, 32
      %v1380 = vpop.permute.xlu0 %1379
      %1382 = vst.msk [vmem:[#allocation2 + $0x38] sm:$0xff] %vm381, %v1380
      %v1383 = vld [vmem:[#allocation2] sm:$0xff]
      %v1384 = vld [vmem:[#allocation2 + $0x8] sm:$0xff]
      %v1385 = vld [vmem:[#allocation2 + $0x10] sm:$0xff]
      %v1386 = vld [vmem:[#allocation2 + $0x18] sm:$0xff]
      %v1387 = vld [vmem:[#allocation2 + $0x20] sm:$0xff]
      %v1388 = vld [vmem:[#allocation2 + $0x28] sm:$0xff]
      %v1389 = vld [vmem:[#allocation2 + $0x30] sm:$0xff]
      %v1390 = vld [vmem:[#allocation2 + $0x38] sm:$0xff]
      %v1392 = vsel %vm381, %v1383, 0
      %v1395 = vsel %vm381, %v1384, 0
      %v1398 = vsel %vm381, %v1385, 0
      %v1401 = vsel %vm381, %v1386, 0
      %v1404 = vsel %vm381, %v1387, 0
      %v1407 = vsel %vm381, %v1388, 0
      %v1410 = vsel %vm381, %v1389, 0
      %v1413 = vsel %vm381, %v1390, 0
      %1415 = vmatprep.subr.mxu0 0.0
      %1416 = vmatpush1.msra.mxu0 0.0
      %1417 = vmatprep.subr.mxu0 0.0
      %1418 = vmatpush1.msra.mxu0 0.0
      %1419 = vmatprep.subr.mxu0 0.0
      %1420 = vmatpush1.msra.mxu0 0.0
      %1421 = vmatprep.subr.mxu0 0.0
      %1422 = vmatpush1.msra.mxu0 0.0
      %1423 = vmatprep.subr.mxu0 0.0
      %1424 = vmatpush1.msra.mxu0 0.0
      %1425 = vmatprep.subr.mxu0 0.0
      %1426 = vmatpush1.msra.mxu0 0.0
      %1427 = vmatprep.subr.mxu0 0.0
      %1428 = vmatpush1.msra.mxu0 0.0
      %1429 = vmatprep.subr.mxu0 0.0
      %1430 = vmatpush1.msra.mxu0 0.0
      %1431 = vmatprep.subr.mxu0 0.0
      %1432 = vmatpush1.msra.mxu0 0.0
      %1433 = vmatprep.subr.mxu0 0.0
      %1434 = vmatpush1.msra.mxu0 0.0
      %1435 = vmatprep.subr.mxu0 0.0
      %1436 = vmatpush1.msra.mxu0 0.0
      %1437 = vmatprep.subr.mxu0 0.0
      %1438 = vmatpush1.msra.mxu0 0.0
      %1439 = vmatprep.subr.mxu0 0.0
      %1440 = vmatpush1.msra.mxu0 %v358
      %1441 = vmatprep.subr.mxu0 0.0
      %1442 = vmatpush1.msra.mxu0 %v357
      %1443 = vmatprep.subr.mxu0 0.0
      %1444 = vmatpush1.msra.mxu0 %v356
      %1445 = vmatprep.subr.mxu0 0.0
      %1446 = vmatpush1.msra.mxu0 %v355
      %1447 = vmatprep.subr.mxu0 0.0
      %1448 = vmatpush2.msra.mxu0 0.0
      %1449 = vmatprep.subr.mxu0 0.0
      %1450 = vmatpush2.msra.mxu0 0.0
      %1451 = vmatprep.subr.mxu0 0.0
      %1452 = vmatpush2.msra.mxu0 0.0
      %1453 = vmatprep.subr.mxu0 0.0
      %1454 = vmatpush2.msra.mxu0 0.0
      %1455 = vmatprep.subr.mxu0 0.0
      %1456 = vmatpush2.msra.mxu0 0.0
      %1457 = vmatprep.subr.mxu0 0.0
      %1458 = vmatpush2.msra.mxu0 0.0
      %1459 = vmatprep.subr.mxu0 0.0
      %1460 = vmatpush2.msra.mxu0 0.0
      %1461 = vmatprep.subr.mxu0 0.0
      %1462 = vmatpush2.msra.mxu0 0.0
      %1463 = vmatprep.subr.mxu0 0.0
      %1464 = vmatpush2.msra.mxu0 0.0
      %1465 = vmatprep.subr.mxu0 0.0
      %1466 = vmatpush2.msra.mxu0 0.0
      %1467 = vmatprep.subr.mxu0 0.0
      %1468 = vmatpush2.msra.mxu0 0.0
      %1469 = vmatprep.subr.mxu0 0.0
      %1470 = vmatpush2.msra.mxu0 0.0
      %1471 = vmatprep.subr.mxu0 0.0
      %1472 = vmatpush2.msra.mxu0 0.0
      %1473 = vmatprep.subr.mxu0 0.0
      %1474 = vmatpush2.msra.mxu0 0.0
      %1475 = vmatprep.subr.mxu0 0.0
      %1476 = vmatpush2.msra.mxu0 0.0
      %1477 = vmatprep.subr.mxu0 0.0
      %1478 = vmatpush2.msra.mxu0 0.0
      %1479 = vmatprep.mubr.f32.mxu0 0.0
      %1480 = vmatmul.mubr.f32.gmra.mxu0 %v1392
      %v1481 = vpop.f32.mrf.mxu0
      %v1482 = vadd.f32 0.0, %v1481
      %v1483 = vpop.f32.mrf.mxu0
      %1484 = vmatprep.mubr.f32.mxu0 0.0
      %1485 = vmatmul.mubr.f32.gmra.mxu0 %v1395
      %v1486 = vpop.f32.mrf.mxu0
      %v1487 = vadd.f32 0.0, %v1486
      %v1488 = vpop.f32.mrf.mxu0
      %1489 = vmatprep.mubr.f32.mxu0 0.0
      %1490 = vmatmul.mubr.f32.gmra.mxu0 %v1398
      %v1491 = vpop.f32.mrf.mxu0
      %v1492 = vadd.f32 0.0, %v1491
      %v1493 = vpop.f32.mrf.mxu0
      %1494 = vmatprep.mubr.f32.mxu0 0.0
      %1495 = vmatmul.mubr.f32.gmra.mxu0 %v1401
      %v1496 = vpop.f32.mrf.mxu0
      %v1497 = vadd.f32 0.0, %v1496
      %v1498 = vpop.f32.mrf.mxu0
      %1499 = vmatprep.mubr.f32.mxu0 0.0
      %1500 = vmatmul.mubr.f32.gmra.mxu0 %v1404
      %v1501 = vpop.f32.mrf.mxu0
      %v1502 = vadd.f32 0.0, %v1501
      %v1503 = vpop.f32.mrf.mxu0
      %1504 = vmatprep.mubr.f32.mxu0 0.0
      %1505 = vmatmul.mubr.f32.gmra.mxu0 %v1407
      %v1506 = vpop.f32.mrf.mxu0
      %v1507 = vadd.f32 0.0, %v1506
      %v1508 = vpop.f32.mrf.mxu0
      %1509 = vmatprep.mubr.f32.mxu0 0.0
      %1510 = vmatmul.mubr.f32.gmra.mxu0 %v1410
      %v1511 = vpop.f32.mrf.mxu0
      %v1512 = vadd.f32 0.0, %v1511
      %v1513 = vpop.f32.mrf.mxu0
      %1514 = vmatprep.mubr.f32.mxu0 0.0
      %1515 = vmatmul.mubr.f32.gmra.mxu0 %v1413
      %v1516 = vpop.f32.mrf.mxu0
      %v1517 = vadd.f32 0.0, %v1516
      %v1518 = vpop.f32.mrf.mxu0
      %1519 = vdwg.mxu0
      %vm1520 = vcmask 64512
      %1521 = vst.msk [vmem:[%s345] sm:$0xff] %vm1520, %v1482
      %1522 = vst.msk [vmem:[%s345 + $0x8] sm:$0xff] %vm1520, %v1487
      %1523 = vst.msk [vmem:[%s345 + $0x10] sm:$0xff] %vm1520, %v1492
      %1524 = vst.msk [vmem:[%s345 + $0x18] sm:$0xff] %vm1520, %v1497
      %1525 = vst.msk [vmem:[%s345 + $0x20] sm:$0xff] %vm1520, %v1502
      %1526 = vst.msk [vmem:[%s345 + $0x28] sm:$0xff] %vm1520, %v1507
      %1527 = vst.msk [vmem:[%s345 + $0x30] sm:$0xff] %vm1520, %v1512
      %1528 = vst.msk [vmem:[%s345 + $0x38] sm:$0xff] %vm1520, %v1517
      %p1529 = scmp.lt.s32.totalorder %s17, 1
      %s1530 = scalar_select %p1529, %s17, 1
      %s1531 = smul.addr %s1530, 8
      %s1532 = smul.addr %s1531, 8
      %s1533 = scalar_lea.vmem %s6, %s1532
      // Predicated region
      $region45: #{tpu_custom_call.1} parent=43 // pred_check
        %p1534 = pneg %p191
      $region46: #{tpu_custom_call.1} parent=43 // pred_check_branch
        %1536 = sbr.rel (%p1534) target = $region48
      $region47: #{tpu_custom_call.1} parent=43 // pred_region
        _
      $region48: #{tpu_custom_call.1} parent=43 // pred_fallthru
        _
    $region44: #{tpu_custom_call.1} parent=5 // pred_fallthru
      _
    %p1537 = scmp.le.s32.totalorder 2, %s12
    // Predicated region
    $region49: #{tpu_custom_call.1} parent=5 // pred_check
      %p1538 = pneg %p1537
    $region50: #{tpu_custom_call.1} parent=5 // pred_check_branch
      %1540 = sbr.rel (%p1538) target = $region52
    $region51: #{tpu_custom_call.1} parent=5 // pred_region
      %s1541 = ssub.s32 %s12, 2
      // Predicated region
      $region53: #{tpu_custom_call.1} parent=51 // pred_check
        %p1542 = pneg %p197
      $region54: #{tpu_custom_call.1} parent=51 // pred_check_branch
        %1544 = sbr.rel (%p1542) target = $region56
      $region55: #{tpu_custom_call.1} parent=51 // pred_region
        %p1545 = scmp.lt.s32.totalorder %s18, 1
        %s1546 = scalar_select %p1545, %s18, 1
        %s1547 = smul.addr %s1546, 8
        %s1548 = smul.addr %s1547, 8
        %s1549 = scalar_lea.vmem %s6, %s1548
      $region56: #{tpu_custom_call.1} parent=51 // pred_fallthru
        _
    $region52: #{tpu_custom_call.1} parent=5 // pred_fallthru
      _
  $region6: #{tpu_custom_call.1} parent=0 // loop_footer
    %s16 = sadd.s32 1, %s12
  $region7: #{tpu_custom_call.1} parent=0 // loop_footer_branch
    %11 = sbr.rel target = $region3
  $region8: #{tpu_custom_call.1} parent=0 // loop_exit
    _

</llo_original>
